<compile_context>
chip_gen: v5e
topology: v5e:2x2
jax: 0.10.0
libtpu: 0.0.40
codegen_flags: <defaults>
</compile_context>

<pallas_src>
import functools

import jax
import jax.numpy as jnp
from jax.experimental import pallas as pl
from jax.experimental.pallas import tpu as pltpu

# ---------------------------------------------------------------------------
# Model dimensions (consistent with the module's constructor args).
# ---------------------------------------------------------------------------
DX = 16      # data_encoder.input_dim  (raw data features)
DU = 8       # env-variable dim (one-hot environment)
H = 32       # hidden_dims = [32]
DR = 16      # data_encoder.output_dim
DRU = 8      # env_encoder.output_dim
L = 8        # latent_dim

ALPHA = 0.1  # activations = 'xtanh_0.1'

# Fused widths.
D_IN1 = DX + DU      # 24  : concat(x, u) -> front block-diag layer-1 K
D_H1 = 2 * H         # 64  : [de hidden | ee hidden]
D_REP = DR + DRU     # 24  : xu_rep = [x_rep | u_rep]
D_H2 = 2 * H         # 64  : [mu hidden | lv hidden]
D_ML = 2 * L         # 16  : [mu | logv]

IN_W = D_IN1 + L     # 32  : packed input slab  [x | u | eps]
OUT_W = DX + 3 * L   # 40  : packed output slab [x_hat | mean | var | z]

# Weight-slab row offsets (all multiples of 8 -> sublane-tile aligned).
R_WA = 0                   # (D_IN1, D_H1)  block-diag(de_w1, ee_w1)
R_WB = R_WA + D_IN1        # (D_H1, D_REP)  block-diag(de_w2, ee_w2)
R_WC = R_WB + D_H1         # (D_REP, D_H2)  [mu_w1 | lv_w1]
R_WD = R_WC + D_REP        # (D_H2, D_ML)   block-diag(mu_w2, lv_w2)
R_WE = R_WD + D_H2         # (L, H)         dc_w1
R_WF = R_WE + L            # (H, DX)        dc_w2
W_ROWS = R_WF + H          # 216
PARAM_LANES = 128
B_ROWS = 8                 # bias slab rows (6 used)

# Batch tiling (256 fills the MXU M dimension on v5e/v6e/v7x; per-step VMEM
# footprint at these feature widths is << the scoped VMEM limit everywhere).
TILE_B = 256
BATCH = 1024               # demo batch


def _xtanh(x):
    return jnp.tanh(x) + ALPHA * x


def _dot(a, b):
    return jnp.dot(a, b, preferred_element_type=jnp.float32)


def _mlp2(x, w1, b1, w2, b2):
    """Single-hidden-layer MLP: xtanh hidden activation, linear output."""
    h = _xtanh(_dot(x, w1) + b1)
    return _dot(h, w2) + b2


# ---------------------------------------------------------------------------
# Pallas kernel: full CIVAE.forward for one batch tile.
# ---------------------------------------------------------------------------
def civae_forward_kernel(in_ref, w_ref, b_ref, out_ref):
    # Packed inputs: [x | u | eps]  ->  concat(x, u) is a contiguous slice.
    xu = in_ref[:, 0:D_IN1]                      # (TB, 24)
    eps = in_ref[:, D_IN1:D_IN1 + L]             # (TB, 8)

    # Static slices of the resident parameter slabs (no DMA, just VMEM loads).
    wa = w_ref[R_WA:R_WA + D_IN1, 0:D_H1]        # (24, 64)
    wb = w_ref[R_WB:R_WB + D_H1, 0:D_REP]        # (64, 24)
    wc = w_ref[R_WC:R_WC + D_REP, 0:D_H2]        # (24, 64)
    wd = w_ref[R_WD:R_WD + D_H2, 0:D_ML]         # (64, 16)
    we = w_ref[R_WE:R_WE + L, 0:H]               # ( 8, 32)
    wf = w_ref[R_WF:R_WF + H, 0:DX]              # (32, 16)

    ba = b_ref[0:1, 0:D_H1]
    bb = b_ref[1:2, 0:D_REP]
    bc = b_ref[2:3, 0:D_H2]
    bd = b_ref[3:4, 0:D_ML]
    be = b_ref[4:5, 0:H]
    bf = b_ref[5:6, 0:DX]

    # data_encoder + env_encoder fused as block-diagonal matmuls.
    h1 = _xtanh(_dot(xu, wa) + ba)               # (TB, 64) = [de hid | ee hid]
    xu_rep = _dot(h1, wb) + bb                   # (TB, 24) = [x_rep | u_rep]

    # encoder_mu + encoder_logv fused.
    h2 = _xtanh(_dot(xu_rep, wc) + bc)           # (TB, 64) = [mu hid | lv hid]
    ml = _dot(h2, wd) + bd                       # (TB, 16) = [mu | logv]
    mu = ml[:, 0:L]
    logv = ml[:, L:D_ML]

    # reparameterize: z = mu + eps * sqrt(exp(logv)); one exp, one VPU mul.
    std = jnp.exp(0.5 * logv)
    var = std * std
    z = mu + eps * std

    # decoder_mu.
    h3 = _xtanh(_dot(z, we) + be)                # (TB, 32)
    xhat = _dot(h3, wf) + bf                     # (TB, 16)

    # Single lane-packed output tile: [x_hat | mean | var | z].
    out_ref[:, 0:DX] = xhat
    out_ref[:, DX:DX + L] = mu
    out_ref[:, DX + L:DX + 2 * L] = var
    out_ref[:, DX + 2 * L:DX + 3 * L] = z


# ---------------------------------------------------------------------------
# Parameter packing (done once, outside the kernel).
# ---------------------------------------------------------------------------
def _block_diag(a, b):
    ka, na = a.shape
    kb, nb = b.shape
    top = jnp.concatenate([a, jnp.zeros((ka, nb), a.dtype)], axis=1)
    bot = jnp.concatenate([jnp.zeros((kb, na), b.dtype), b], axis=1)
    return jnp.concatenate([top, bot], axis=0)


def _pad_lanes(w):
    return jnp.pad(w, ((0, 0), (0, PARAM_LANES - w.shape[1])))


def pack_params(p):
    wa = _block_diag(p["de_w1"], p["ee_w1"])                   # (24, 64)
    wb = _block_diag(p["de_w2"], p["ee_w2"])                   # (64, 24)
    wc = jnp.concatenate([p["mu_w1"], p["lv_w1"]], axis=1)     # (24, 64)
    wd = _block_diag(p["mu_w2"], p["lv_w2"])                   # (64, 16)
    we = p["dc_w1"]                                            # ( 8, 32)
    wf = p["dc_w2"]                                            # (32, 16)
    w_slab = jnp.concatenate(
        [_pad_lanes(w) for w in (wa, wb, wc, wd, we, wf)], axis=0)  # (216,128)

    biases = [
        jnp.concatenate([p["de_b1"], p["ee_b1"]], axis=1),     # (1, 64)
        jnp.concatenate([p["de_b2"], p["ee_b2"]], axis=1),     # (1, 24)
        jnp.concatenate([p["mu_b1"], p["lv_b1"]], axis=1),     # (1, 64)
        jnp.concatenate([p["mu_b2"], p["lv_b2"]], axis=1),     # (1, 16)
        p["dc_b1"],                                            # (1, 32)
        p["dc_b2"],                                            # (1, 16)
    ]
    b_rows = [_pad_lanes(b) for b in biases]
    b_rows.append(jnp.zeros((B_ROWS - len(b_rows), PARAM_LANES), jnp.float32))
    b_slab = jnp.concatenate(b_rows, axis=0)                   # (8, 128)
    return w_slab, b_slab


# ---------------------------------------------------------------------------
# Wrapper.
# ---------------------------------------------------------------------------
def civae_forward(x, u, eps, params):
    batch = x.shape[0]
    w_slab, b_slab = pack_params(params)

    in_slab = jnp.concatenate([x, u, eps], axis=1)             # (B, 32)
    b_pad = ((batch + TILE_B - 1) // TILE_B) * TILE_B
    if b_pad != batch:
        in_slab = jnp.pad(in_slab, ((0, b_pad - batch), (0, 0)))
    grid = (b_pad // TILE_B,)

    out = pl.pallas_call(
        civae_forward_kernel,
        out_shape=jax.ShapeDtypeStruct((b_pad, OUT_W), jnp.float32),
        grid_spec=pltpu.PrefetchScalarGridSpec(
            num_scalar_prefetch=0,
            grid=grid,
            in_specs=[
                # batch tile: double-buffered per grid step
                pl.BlockSpec((TILE_B, IN_W), lambda i: (i, 0)),
                # parameter slabs: constant block index -> VMEM-resident
                pl.BlockSpec((W_ROWS, PARAM_LANES), lambda i: (0, 0)),
                pl.BlockSpec((B_ROWS, PARAM_LANES), lambda i: (0, 0)),
            ],
            out_specs=pl.BlockSpec((TILE_B, OUT_W), lambda i: (i, 0)),
        ),
        compiler_params=pltpu.CompilerParams(
            dimension_semantics=("parallel",)),
    )(in_slab, w_slab, b_slab)

    out = out[:batch]
    x_hat = out[:, 0:DX]
    mean = out[:, DX:DX + L]
    var = out[:, DX + L:DX + 2 * L]
    z = out[:, DX + 2 * L:DX + 3 * L]
    return x_hat, mean, var, z


# ---------------------------------------------------------------------------
# Deterministic parameter init (synthetic; mirrors the __init__ shapes).
# ---------------------------------------------------------------------------
def init_params(key):
    def linear(key, fan_in, fan_out):
        kw, kb = jax.random.split(key)
        w = jax.random.normal(kw, (fan_in, fan_out), jnp.float32) / jnp.sqrt(
            jnp.float32(fan_in))
        b = 0.01 * jax.random.normal(kb, (1, fan_out), jnp.float32)
        return w, b

    keys = jax.random.split(key, 10)
    p = {}
    p["de_w1"], p["de_b1"] = linear(keys[0], DX, H)
    p["de_w2"], p["de_b2"] = linear(keys[1], H, DR)
    p["ee_w1"], p["ee_b1"] = linear(keys[2], DU, H)
    p["ee_w2"], p["ee_b2"] = linear(keys[3], H, DRU)
    p["mu_w1"], p["mu_b1"] = linear(keys[4], DR + DRU, H)
    p["mu_w2"], p["mu_b2"] = linear(keys[5], H, L)
    p["lv_w1"], p["lv_b1"] = linear(keys[6], DR + DRU, H)
    p["lv_w2"], p["lv_b2"] = linear(keys[7], H, L)
    p["dc_w1"], p["dc_b1"] = linear(keys[8], L, H)
    p["dc_w2"], p["dc_b2"] = linear(keys[9], H, DX)
    return p


# ---------------------------------------------------------------------------
# Pure-JAX reference (mirrors the torch code with an explicit concat).
# ---------------------------------------------------------------------------
def civae_forward_ref(x, u, eps, p):
    x_rep = _mlp2(x, p["de_w1"], p["de_b1"], p["de_w2"], p["de_b2"])
    u_rep = _mlp2(u, p["ee_w1"], p["ee_b1"], p["ee_w2"], p["ee_b2"])
    xu = jnp.concatenate([x_rep, u_rep], axis=1)
    mu = _mlp2(xu, p["mu_w1"], p["mu_b1"], p["mu_w2"], p["mu_b2"])
    logv = _mlp2(xu, p["lv_w1"], p["lv_b1"], p["lv_w2"], p["lv_b2"])
    var = jnp.exp(logv)
    z = mu + eps * jnp.sqrt(var)
    x_hat = _mlp2(z, p["dc_w1"], p["dc_b1"], p["dc_w2"], p["dc_b2"])
    return x_hat, mu, var, z


if __name__ == "__main__":
    key = jax.random.PRNGKey(0)
    k_par, k_x, k_u, k_eps = jax.random.split(key, 4)

    params = init_params(k_par)
    x = jax.random.normal(k_x, (BATCH, DX), jnp.float32)
    # environment variable: one-hot over DU environments
    env_ids = jax.random.randint(k_u, (BATCH,), 0, DU)
    u = jax.nn.one_hot(env_ids, DU, dtype=jnp.float32)
    # eps plays the role of torch.randn_like(mu) in reparameterize
    # TODO(synk): noise could be generated in-kernel via pltpu.prng_random_bits
    # instead of being passed in; kept external to match the reference exactly.
    eps = jax.random.normal(k_eps, (BATCH, L), jnp.float32)

    fwd = jax.jit(civae_forward)
    x_hat, mean, var, z = jax.block_until_ready(fwd(x, u, eps, params))

    x_hat_r, mean_r, var_r, z_r = civae_forward_ref(x, u, eps, params)
    assert jnp.allclose(x_hat, x_hat_r, atol=1e-4, rtol=1e-4)
    assert jnp.allclose(mean, mean_r, atol=1e-4, rtol=1e-4)
    assert jnp.allclose(var, var_r, atol=1e-4, rtol=1e-4)
    assert jnp.allclose(z, z_r, atol=1e-4, rtol=1e-4)

    print("KERNEL_OK")
</pallas_src>

<mosaic_0001>
module attributes {stable_mosaic.version = 11 : i64} {
  func.func @civae_forward_kernel(%arg0: i32, %arg1: memref<256x32xf32, #tpu.memory_space<vmem>>, %arg2: memref<216x128xf32, #tpu.memory_space<vmem>>, %arg3: memref<8x128xf32, #tpu.memory_space<vmem>>, %arg4: memref<256x40xf32, #tpu.memory_space<vmem>>) attributes {dimension_semantics = [#tpu.dimension_semantics<parallel>], iteration_bounds = array<i64: 4>, scalar_prefetch = 0 : i64, scratch_operands = 0 : i64, tpu.core_type = #tpu.core_type<tc>, window_params = [{transform_indices = @transform_0, window_bounds = array<i64: 256, 32>}, {pipeline_mode = #tpu.pipeline_mode<synchronous>, transform_indices = @transform_1, window_bounds = array<i64: 216, 128>}, {pipeline_mode = #tpu.pipeline_mode<synchronous>, transform_indices = @transform_2, window_bounds = array<i64: 8, 128>}, {transform_indices = @transform_3, window_bounds = array<i64: 256, 40>}]} {
    %c0 = arith.constant 0 : index
    %c0_0 = arith.constant 0 : index
    %0 = vector.load %arg1[%c0, %c0_0] : memref<256x32xf32, #tpu.memory_space<vmem>>, vector<256x24xf32>
    %c0_1 = arith.constant 0 : index
    %c24 = arith.constant 24 : index
    %1 = vector.load %arg1[%c0_1, %c24] : memref<256x32xf32, #tpu.memory_space<vmem>>, vector<256x8xf32>
    %c0_2 = arith.constant 0 : index
    %c0_3 = arith.constant 0 : index
    %2 = vector.load %arg2[%c0_2, %c0_3] : memref<216x128xf32, #tpu.memory_space<vmem>>, vector<24x64xf32>
    %c24_4 = arith.constant 24 : index
    %c0_5 = arith.constant 0 : index
    %3 = vector.load %arg2[%c24_4, %c0_5] : memref<216x128xf32, #tpu.memory_space<vmem>>, vector<64x24xf32>
    %c88 = arith.constant 88 : index
    %c0_6 = arith.constant 0 : index
    %4 = vector.load %arg2[%c88, %c0_6] : memref<216x128xf32, #tpu.memory_space<vmem>>, vector<24x64xf32>
    %c112 = arith.constant 112 : index
    %c0_7 = arith.constant 0 : index
    %5 = vector.load %arg2[%c112, %c0_7] : memref<216x128xf32, #tpu.memory_space<vmem>>, vector<64x16xf32>
    %c176 = arith.constant 176 : index
    %c0_8 = arith.constant 0 : index
    %6 = vector.load %arg2[%c176, %c0_8] : memref<216x128xf32, #tpu.memory_space<vmem>>, vector<8x32xf32>
    %c184 = arith.constant 184 : index
    %c0_9 = arith.constant 0 : index
    %7 = vector.load %arg2[%c184, %c0_9] : memref<216x128xf32, #tpu.memory_space<vmem>>, vector<32x16xf32>
    %c0_10 = arith.constant 0 : index
    %c0_11 = arith.constant 0 : index
    %8 = vector.load %arg3[%c0_10, %c0_11] : memref<8x128xf32, #tpu.memory_space<vmem>>, vector<1x64xf32>
    %c1 = arith.constant 1 : index
    %c0_12 = arith.constant 0 : index
    %9 = vector.load %arg3[%c1, %c0_12] : memref<8x128xf32, #tpu.memory_space<vmem>>, vector<1x24xf32>
    %c2 = arith.constant 2 : index
    %c0_13 = arith.constant 0 : index
    %10 = vector.load %arg3[%c2, %c0_13] : memref<8x128xf32, #tpu.memory_space<vmem>>, vector<1x64xf32>
    %c3 = arith.constant 3 : index
    %c0_14 = arith.constant 0 : index
    %11 = vector.load %arg3[%c3, %c0_14] : memref<8x128xf32, #tpu.memory_space<vmem>>, vector<1x16xf32>
    %c4 = arith.constant 4 : index
    %c0_15 = arith.constant 0 : index
    %12 = vector.load %arg3[%c4, %c0_15] : memref<8x128xf32, #tpu.memory_space<vmem>>, vector<1x32xf32>
    %c5 = arith.constant 5 : index
    %c0_16 = arith.constant 0 : index
    %13 = vector.load %arg3[%c5, %c0_16] : memref<8x128xf32, #tpu.memory_space<vmem>>, vector<1x16xf32>
    %cst = arith.constant dense<0.000000e+00> : vector<256x64xf32>
    %14 = tpu.matmul %0, %2, %cst {dimension_numbers = #tpu.dot_dimension_numbers<[1], [0], [0], [1], [0, 0, 1, 1], [], []>} : vector<256x24xf32>, vector<24x64xf32>, vector<256x64xf32> -> vector<256x64xf32>
    %15 = vector.broadcast %8 : vector<1x64xf32> to vector<256x64xf32>
    %16 = arith.addf %14, %15 : vector<256x64xf32>
    %17 = math.tanh %16 : vector<256x64xf32>
    %cst_17 = arith.constant 1.000000e-01 : f32
    %18 = vector.broadcast %cst_17 : f32 to vector<256x64xf32>
    %19 = arith.mulf %18, %16 : vector<256x64xf32>
    %20 = arith.addf %17, %19 : vector<256x64xf32>
    %cst_18 = arith.constant dense<0.000000e+00> : vector<256x24xf32>
    %21 = tpu.matmul %20, %3, %cst_18 {dimension_numbers = #tpu.dot_dimension_numbers<[1], [0], [0], [1], [0, 0, 1, 1], [], []>} : vector<256x64xf32>, vector<64x24xf32>, vector<256x24xf32> -> vector<256x24xf32>
    %22 = vector.broadcast %9 : vector<1x24xf32> to vector<256x24xf32>
    %23 = arith.addf %21, %22 : vector<256x24xf32>
    %cst_19 = arith.constant dense<0.000000e+00> : vector<256x64xf32>
    %24 = tpu.matmul %23, %4, %cst_19 {dimension_numbers = #tpu.dot_dimension_numbers<[1], [0], [0], [1], [0, 0, 1, 1], [], []>} : vector<256x24xf32>, vector<24x64xf32>, vector<256x64xf32> -> vector<256x64xf32>
    %25 = vector.broadcast %10 : vector<1x64xf32> to vector<256x64xf32>
    %26 = arith.addf %24, %25 : vector<256x64xf32>
    %27 = math.tanh %26 : vector<256x64xf32>
    %cst_20 = arith.constant 1.000000e-01 : f32
    %28 = vector.broadcast %cst_20 : f32 to vector<256x64xf32>
    %29 = arith.mulf %28, %26 : vector<256x64xf32>
    %30 = arith.addf %27, %29 : vector<256x64xf32>
    %cst_21 = arith.constant dense<0.000000e+00> : vector<256x16xf32>
    %31 = tpu.matmul %30, %5, %cst_21 {dimension_numbers = #tpu.dot_dimension_numbers<[1], [0], [0], [1], [0, 0, 1, 1], [], []>} : vector<256x64xf32>, vector<64x16xf32>, vector<256x16xf32> -> vector<256x16xf32>
    %32 = vector.broadcast %11 : vector<1x16xf32> to vector<256x16xf32>
    %33 = arith.addf %31, %32 : vector<256x16xf32>
    %34 = vector.extract_strided_slice %33 {offsets = [0, 0], sizes = [256, 8], strides = [1, 1]} : vector<256x16xf32> to vector<256x8xf32>
    %35 = vector.extract_strided_slice %33 {offsets = [0, 8], sizes = [256, 8], strides = [1, 1]} : vector<256x16xf32> to vector<256x8xf32>
    %cst_22 = arith.constant 5.000000e-01 : f32
    %36 = vector.broadcast %cst_22 : f32 to vector<256x8xf32>
    %37 = arith.mulf %36, %35 : vector<256x8xf32>
    %38 = math.exp %37 : vector<256x8xf32>
    %39 = arith.mulf %38, %38 : vector<256x8xf32>
    %40 = arith.mulf %1, %38 : vector<256x8xf32>
    %41 = arith.addf %34, %40 : vector<256x8xf32>
    %cst_23 = arith.constant dense<0.000000e+00> : vector<256x32xf32>
    %42 = tpu.matmul %41, %6, %cst_23 {dimension_numbers = #tpu.dot_dimension_numbers<[1], [0], [0], [1], [0, 0, 1, 1], [], []>} : vector<256x8xf32>, vector<8x32xf32>, vector<256x32xf32> -> vector<256x32xf32>
    %43 = vector.broadcast %12 : vector<1x32xf32> to vector<256x32xf32>
    %44 = arith.addf %42, %43 : vector<256x32xf32>
    %45 = math.tanh %44 : vector<256x32xf32>
    %cst_24 = arith.constant 1.000000e-01 : f32
    %46 = vector.broadcast %cst_24 : f32 to vector<256x32xf32>
    %47 = arith.mulf %46, %44 : vector<256x32xf32>
    %48 = arith.addf %45, %47 : vector<256x32xf32>
    %cst_25 = arith.constant dense<0.000000e+00> : vector<256x16xf32>
    %49 = tpu.matmul %48, %7, %cst_25 {dimension_numbers = #tpu.dot_dimension_numbers<[1], [0], [0], [1], [0, 0, 1, 1], [], []>} : vector<256x32xf32>, vector<32x16xf32>, vector<256x16xf32> -> vector<256x16xf32>
    %50 = vector.broadcast %13 : vector<1x16xf32> to vector<256x16xf32>
    %51 = arith.addf %49, %50 : vector<256x16xf32>
    %c0_26 = arith.constant 0 : index
    %c0_27 = arith.constant 0 : index
    %52 = vector.load %arg4[%c0_26, %c0_27] : memref<256x40xf32, #tpu.memory_space<vmem>>, vector<256x16xf32>
    tpu.vector_store %arg4[%c0_26, %c0_27], %51 {strides = array<i32>} : memref<256x40xf32, #tpu.memory_space<vmem>>, vector<256x16xf32>,
    %c0_28 = arith.constant 0 : index
    %c16 = arith.constant 16 : index
    %53 = vector.load %arg4[%c0_28, %c16] : memref<256x40xf32, #tpu.memory_space<vmem>>, vector<256x8xf32>
    tpu.vector_store %arg4[%c0_28, %c16], %34 {strides = array<i32>} : memref<256x40xf32, #tpu.memory_space<vmem>>, vector<256x8xf32>,
    %c0_29 = arith.constant 0 : index
    %c24_30 = arith.constant 24 : index
    %54 = vector.load %arg4[%c0_29, %c24_30] : memref<256x40xf32, #tpu.memory_space<vmem>>, vector<256x8xf32>
    tpu.vector_store %arg4[%c0_29, %c24_30], %39 {strides = array<i32>} : memref<256x40xf32, #tpu.memory_space<vmem>>, vector<256x8xf32>,
    %c0_31 = arith.constant 0 : index
    %c32 = arith.constant 32 : index
    %55 = vector.load %arg4[%c0_31, %c32] : memref<256x40xf32, #tpu.memory_space<vmem>>, vector<256x8xf32>
    tpu.vector_store %arg4[%c0_31, %c32], %41 {strides = array<i32>} : memref<256x40xf32, #tpu.memory_space<vmem>>, vector<256x8xf32>,
    return
  }
  func.func @transform_0(%arg0: i32) -> (i32, i32) {
    %c0_i32 = arith.constant 0 : i32
    %c0_i32_0 = arith.constant 0 : i32
    return %arg0, %c0_i32 : i32, i32
  }
  func.func @transform_1(%arg0: i32) -> (i32, i32) {
    %c0_i32 = arith.constant 0 : i32
    %c0_i32_0 = arith.constant 0 : i32
    %c0_i32_1 = arith.constant 0 : i32
    return %c0_i32, %c0_i32_0 : i32, i32
  }
  func.func @transform_2(%arg0: i32) -> (i32, i32) {
    %c0_i32 = arith.constant 0 : i32
    %c0_i32_0 = arith.constant 0 : i32
    %c0_i32_1 = arith.constant 0 : i32
    return %c0_i32, %c0_i32_0 : i32, i32
  }
  func.func @transform_3(%arg0: i32) -> (i32, i32) {
    %c0_i32 = arith.constant 0 : i32
    %c0_i32_0 = arith.constant 0 : i32
    return %arg0, %c0_i32 : i32, i32
  }
}

</mosaic_0001>

<llo_original>
// kernel: civae_forward.1
$region0: #{civae_forward.1}
  #allocation0 [shape = 'u32[]', space=smem, size = 0x4, offset = 0x4, fixed_abs, tag = 'smem constant byte address 0x4 - core index']
  #allocation1 [shape = 'u32[72,128]{1,0:T(1,128)}', space=vmem, size = 0x9000, scoped, tag = 'internal scratch']
  %s0 = inlined_call_operand.vmem [shape: f32[1024,32], index: 0, kind: input, shape index: {}]
  %s1 = inlined_call_operand.vmem [shape: f32[216,128], index: 1, kind: input, shape index: {}]
  %s2 = inlined_call_operand.vmem [shape: f32[8,128], index: 2, kind: input, shape index: {}]
  %s3 = inlined_call_operand.vmem [shape: f32[1024,40], index: 3, kind: output, shape index: {}]
  %s4 = sld [smem:[#allocation0]]
  $region45: #{civae_forward.1} parent=0
    _
  %s6 = ssub.s32 1, %s4
  %s7 = scalar_select 0, %s6, %s4
  loop: start=0, step=1, limit=6
  $region2: #{civae_forward.1} parent=0 // loop_pre_header
    _
  $region3: #{civae_forward.1} parent=0 // loop_header
    %s9 = sphi 0, %s13
    %p10 = scmp.ge.s32.totalorder %s9, 6
    %s19 = sphi 0, %s21
    %s22 = sphi 0, %s19
    %s23 = sphi 0, %s22
    %s39 = sphi 0, %s23
    %s43 = sphi 0, %s43
    %s45 = sphi 0, %s43
    %s46 = sphi 0, %s45
    %s60 = sphi 0, %s46
    %s64 = sphi 0, %s64
    %s66 = sphi 0, %s64
    %s67 = sphi 0, %s66
    %s81 = sphi 0, %s67
    %s87 = sphi 0, %s89
    %s90 = sphi 0, %s87
    %s91 = sphi 0, %s90
    %s107 = sphi 0, %s91
  $region4: #{civae_forward.1} parent=0 // loop_header_branch
    %12 = sbr.rel (%p10) target = $region8
  $region5: #{civae_forward.1} parent=0 // loop_body
    %s14 = ssub.s32 %s9, 1
    %s15 = ssub.s32 %s9, 2
    %s16 = sadd.s32 %s9, 1
    %s17 = ssub.s32 %s9, %s16
    %p18 = scmp.eq.s32.totalorder %s17, 0
    %s20 = sadd.s32 %s19, 1
    %s21 = scalar_select %p18, %s19, %s20
    %p24 = pneg %p18
    %p25 = scmp.eq.s32.totalorder %s9, 3
    %p26 = por %p24, %p25
    %p27 = scmp.ne.s32.totalorder %s19, %s22
    %p28 = scmp.eq.s32.totalorder %s9, 0
    %p29 = por %p27, %p28
    %p30 = scmp.ne.s32.totalorder %s19, %s22
    %p31 = scmp.eq.s32.totalorder %s14, 3
    %p32 = por %p30, %p31
    %p33 = scmp.ne.s32.totalorder %s22, %s23
    %p34 = scmp.eq.s32.totalorder %s14, 0
    %p35 = por %p33, %p34
    %p36 = scmp.ne.s32.totalorder %s22, %s23
    %p37 = scmp.eq.s32.totalorder %s15, 3
    %p38 = por %p36, %p37
    %p40 = scmp.ne.s32.totalorder %s23, %s39
    %p41 = scmp.eq.s32.totalorder %s15, 0
    %p42 = por %p40, %p41
    %s44 = sadd.s32 %s43, 1
    %p47 = scmp.eq.s32.totalorder %s9, 3
    %p48 = scmp.ne.s32.totalorder %s43, %s45
    %p49 = scmp.eq.s32.totalorder %s9, 0
    %p50 = por %p48, %p49
    %p51 = scmp.ne.s32.totalorder %s43, %s45
    %p52 = scmp.eq.s32.totalorder %s14, 3
    %p53 = por %p51, %p52
    %p54 = scmp.ne.s32.totalorder %s45, %s46
    %p55 = scmp.eq.s32.totalorder %s14, 0
    %p56 = por %p54, %p55
    %p57 = scmp.ne.s32.totalorder %s45, %s46
    %p58 = scmp.eq.s32.totalorder %s15, 3
    %p59 = por %p57, %p58
    %p61 = scmp.ne.s32.totalorder %s46, %s60
    %p62 = scmp.eq.s32.totalorder %s15, 0
    %p63 = por %p61, %p62
    %s65 = sadd.s32 %s64, 1
    %p68 = scmp.eq.s32.totalorder %s9, 3
    %p69 = scmp.ne.s32.totalorder %s64, %s66
    %p70 = scmp.eq.s32.totalorder %s9, 0
    %p71 = por %p69, %p70
    %p72 = scmp.ne.s32.totalorder %s64, %s66
    %p73 = scmp.eq.s32.totalorder %s14, 3
    %p74 = por %p72, %p73
    %p75 = scmp.ne.s32.totalorder %s66, %s67
    %p76 = scmp.eq.s32.totalorder %s14, 0
    %p77 = por %p75, %p76
    %p78 = scmp.ne.s32.totalorder %s66, %s67
    %p79 = scmp.eq.s32.totalorder %s15, 3
    %p80 = por %p78, %p79
    %p82 = scmp.ne.s32.totalorder %s67, %s81
    %p83 = scmp.eq.s32.totalorder %s15, 0
    %p84 = por %p82, %p83
    %s85 = ssub.s32 %s9, %s16
    %p86 = scmp.eq.s32.totalorder %s85, 0
    %s88 = sadd.s32 %s87, 1
    %s89 = scalar_select %p86, %s87, %s88
    %p92 = pneg %p86
    %p93 = scmp.eq.s32.totalorder %s9, 3
    %p94 = por %p92, %p93
    %p95 = scmp.ne.s32.totalorder %s87, %s90
    %p96 = scmp.eq.s32.totalorder %s9, 0
    %p97 = por %p95, %p96
    %p98 = scmp.ne.s32.totalorder %s87, %s90
    %p99 = scmp.eq.s32.totalorder %s14, 3
    %p100 = por %p98, %p99
    %p101 = scmp.ne.s32.totalorder %s90, %s91
    %p102 = scmp.eq.s32.totalorder %s14, 0
    %p103 = por %p101, %p102
    %p104 = scmp.ne.s32.totalorder %s90, %s91
    %p105 = scmp.eq.s32.totalorder %s15, 3
    %p106 = por %p104, %p105
    %p108 = scmp.ne.s32.totalorder %s91, %s107
    %p109 = scmp.eq.s32.totalorder %s15, 0
    %p110 = por %p108, %p109
    %p111 = scmp.le.s32.totalorder 1, %s9
    %p112 = scmp.lt.s32.totalorder %s9, 5
    %p113 = pnand %p111, %p112
    %p114 = pneg %p113
    // Predicated region
    $region9: #{civae_forward.1} parent=5 // pred_check
      _
    $region10: #{civae_forward.1} parent=5 // pred_check_branch
      %116 = sbr.rel (%p113) target = $region12
    $region11: #{civae_forward.1} parent=5 // pred_region
      %s117 = ssub.s32 %s9, 1
      // Predicated region
      $region13: #{civae_forward.1} parent=11 // pred_check
        %p118 = pneg %p56
      $region14: #{civae_forward.1} parent=11 // pred_check_branch
        %120 = sbr.rel (%p118) target = $region16
      $region15: #{civae_forward.1} parent=11 // pred_region
        _
      $region16: #{civae_forward.1} parent=11 // pred_fallthru
        _
      // Predicated region
      $region17: #{civae_forward.1} parent=11 // pred_check
        %p121 = pneg %p77
      $region18: #{civae_forward.1} parent=11 // pred_check_branch
        %123 = sbr.rel (%p121) target = $region20
      $region19: #{civae_forward.1} parent=11 // pred_region
        _
      $region20: #{civae_forward.1} parent=11 // pred_fallthru
        _
    $region12: #{civae_forward.1} parent=5 // pred_fallthru
      _
    %p124 = scmp.lt.s32.totalorder %s9, 4
    // Predicated region
    $region21: #{civae_forward.1} parent=5 // pred_check
      %p125 = pneg %p124
    $region22: #{civae_forward.1} parent=5 // pred_check_branch
      %127 = sbr.rel (%p125) target = $region24
    $region23: #{civae_forward.1} parent=5 // pred_region
      // Predicated region
      $region25: #{civae_forward.1} parent=23 // pred_check
        %p128 = pneg %p29
      $region26: #{civae_forward.1} parent=23 // pred_check_branch
        %130 = sbr.rel (%p128) target = $region28
      $region27: #{civae_forward.1} parent=23 // pred_region
        %s131 = smul.u32 32, %s9
        %p132 = scmp.lt.s32.totalorder %s131, 127
        %s133 = scalar_select %p132, %s131, 127
        %s134 = smul.addr %s133, 8
        %s135 = scalar_lea.vmem %s0, %s134
        %s136 = smul.u32 32, %s9
      $region28: #{civae_forward.1} parent=23 // pred_fallthru
        _
    $region24: #{civae_forward.1} parent=5 // pred_fallthru
      _
    %p137 = scmp.le.s32.totalorder 1, %s9
    %p138 = scmp.lt.s32.totalorder %s9, 5
    %p139 = pnand %p137, %p138
    %p140 = pneg %p139
    // Predicated region
    $region29: #{civae_forward.1} parent=5 // pred_check
      _
    $region30: #{civae_forward.1} parent=5 // pred_check_branch
      %142 = sbr.rel (%p139) target = $region32
    $region31: #{civae_forward.1} parent=5 // pred_region
      %s143 = ssub.s32 %s9, 1
      %s144 = smul.u32 32, %s14
      %p145 = scmp.lt.s32.totalorder %s144, 127
      %s146 = scalar_select %p145, %s144, 127
      %s147 = smul.addr %s146, 8
      %s148 = scalar_lea.vmem %s0, %s147
      %p149 = pneg %p35
      %p150 = pneg %p32
      %p151 = pneg %p56
      %p152 = pneg %p53
      %p153 = pneg %p77
      %p154 = pneg %p74
      %p155 = pneg %p103
      %p156 = pneg %p100
      %s157 = smul.u32 32, %s14
      %p158 = scmp.lt.s32.totalorder %s157, 127
      %s159 = scalar_select %p158, %s157, 127
      %s160 = smul.addr %s159, 8
      %s161 = scalar_lea.vmem %s3, %s160
      %s162 = smul.u32 32, %s14
      %p163 = scmp.lt.s32.totalorder %s162, 127
      %s164 = scalar_select %p163, %s162, 127
      %s165 = smul.addr %s164, 8
      %s166 = scalar_lea.vmem %s0, %s165
      %s167 = smul.u32 32, %s14
      %s168 = smul.u32 32, %s14
      %p169 = scmp.lt.s32.totalorder %s168, 127
      %s170 = scalar_select %p169, %s168, 127
      %s171 = smul.addr %s170, 8
      %s172 = scalar_lea.vmem %s3, %s171
      %s173 = smul.u32 32, %s14
      %v174 = vld [vmem:[%s166] sm:$0xff]
      %v175 = vld [vmem:[%s166 + $0x8] sm:$0xff]
      %v176 = vld [vmem:[%s166 + $0x10] sm:$0xff]
      %v177 = vld [vmem:[%s166 + $0x18] sm:$0xff]
      %v178 = vld [vmem:[%s166 + $0x20] sm:$0xff]
      %v179 = vld [vmem:[%s166 + $0x28] sm:$0xff]
      %v180 = vld [vmem:[%s166 + $0x30] sm:$0xff]
      %v181 = vld [vmem:[%s166 + $0x38] sm:$0xff]
      %v182 = vld [vmem:[%s166 + $0x40] sm:$0xff]
      %v183 = vld [vmem:[%s166 + $0x48] sm:$0xff]
      %v184 = vld [vmem:[%s166 + $0x50] sm:$0xff]
      %v185 = vld [vmem:[%s166 + $0x58] sm:$0xff]
      %v186 = vld [vmem:[%s166 + $0x60] sm:$0xff]
      %v187 = vld [vmem:[%s166 + $0x68] sm:$0xff]
      %v188 = vld [vmem:[%s166 + $0x70] sm:$0xff]
      %v189 = vld [vmem:[%s166 + $0x78] sm:$0xff]
      %v190 = vld [vmem:[%s166 + $0x80] sm:$0xff]
      %v191 = vld [vmem:[%s166 + $0x88] sm:$0xff]
      %v192 = vld [vmem:[%s166 + $0x90] sm:$0xff]
      %v193 = vld [vmem:[%s166 + $0x98] sm:$0xff]
      %v194 = vld [vmem:[%s166 + $0xa0] sm:$0xff]
      %v195 = vld [vmem:[%s166 + $0xa8] sm:$0xff]
      %v196 = vld [vmem:[%s166 + $0xb0] sm:$0xff]
      %v197 = vld [vmem:[%s166 + $0xb8] sm:$0xff]
      %v198 = vld [vmem:[%s166 + $0xc0] sm:$0xff]
      %v199 = vld [vmem:[%s166 + $0xc8] sm:$0xff]
      %v200 = vld [vmem:[%s166 + $0xd0] sm:$0xff]
      %v201 = vld [vmem:[%s166 + $0xd8] sm:$0xff]
      %v202 = vld [vmem:[%s166 + $0xe0] sm:$0xff]
      %v203 = vld [vmem:[%s166 + $0xe8] sm:$0xff]
      %v204 = vld [vmem:[%s166 + $0xf0] sm:$0xff]
      %v205 = vld [vmem:[%s166 + $0xf8] sm:$0xff]
      %v206 = vld [vmem:[%s1] sm:$0xff]
      %v207 = vld [vmem:[%s1 + $0x8] sm:$0xff]
      %v208 = vld [vmem:[%s1 + $0x10] sm:$0xff]
      %v209 = vld [vmem:[%s1 + $0x18] sm:$0xff]
      %v210 = vld [vmem:[%s1 + $0x20] sm:$0xff]
      %v211 = vld [vmem:[%s1 + $0x28] sm:$0xff]
      %v212 = vld [vmem:[%s1 + $0x30] sm:$0xff]
      %v213 = vld [vmem:[%s1 + $0x38] sm:$0xff]
      %v214 = vld [vmem:[%s1 + $0x40] sm:$0xff]
      %v215 = vld [vmem:[%s1 + $0x48] sm:$0xff]
      %v216 = vld [vmem:[%s1 + $0x50] sm:$0xff]
      %v217 = vld [vmem:[%s1 + $0x58] sm:$0xff]
      %v218 = vld [vmem:[%s1 + $0x60] sm:$0xff]
      %v219 = vld [vmem:[%s1 + $0x68] sm:$0xff]
      %v220 = vld [vmem:[%s1 + $0x70] sm:$0xff]
      %v221 = vld [vmem:[%s1 + $0x78] sm:$0xff]
      %v222 = vld [vmem:[%s1 + $0x80] sm:$0xff]
      %v223 = vld [vmem:[%s1 + $0x88] sm:$0xff]
      %v224 = vld [vmem:[%s1 + $0x90] sm:$0xff]
      %v225 = vld [vmem:[%s1 + $0x98] sm:$0xff]
      %v226 = vld [vmem:[%s1 + $0xa0] sm:$0xff]
      %v227 = vld [vmem:[%s1 + $0xa8] sm:$0xff]
      %v228 = vld [vmem:[%s1 + $0xb0] sm:$0xff]
      %v229 = vld [vmem:[%s1 + $0xb8] sm:$0xff]
      %v230 = vld [vmem:[%s1 + $0xc0] sm:$0xff]
      %v231 = vld [vmem:[%s1 + $0xc8] sm:$0xff]
      %v232 = vld [vmem:[%s1 + $0xd0] sm:$0xff]
      %v233 = vld [vmem:[%s2] sm:$0x1]
      %v234 = vld [vmem:[%s2 + $0x1] sm:$0x1]
      %v235 = vld [vmem:[%s2 + $0x2] sm:$0x1]
      %v236 = vld [vmem:[%s2 + $0x3] sm:$0x1]
      %v237 = vld [vmem:[%s2 + $0x4] sm:$0x1]
      %v238 = vld [vmem:[%s2 + $0x5] sm:$0x1]
      %v239 = vperm.slane %v233, 0
      %vm240 = vcmask 195584
      %v242 = vsel %vm240, %v174, 0
      %v245 = vsel %vm240, %v175, 0
      %v248 = vsel %vm240, %v176, 0
      %v251 = vsel %vm240, %v177, 0
      %v254 = vsel %vm240, %v178, 0
      %v257 = vsel %vm240, %v179, 0
      %v260 = vsel %vm240, %v180, 0
      %v263 = vsel %vm240, %v181, 0
      %v266 = vsel %vm240, %v182, 0
      %v269 = vsel %vm240, %v183, 0
      %v272 = vsel %vm240, %v184, 0
      %v275 = vsel %vm240, %v185, 0
      %v278 = vsel %vm240, %v186, 0
      %v281 = vsel %vm240, %v187, 0
      %v284 = vsel %vm240, %v188, 0
      %v287 = vsel %vm240, %v189, 0
      %v290 = vsel %vm240, %v190, 0
      %v293 = vsel %vm240, %v191, 0
      %v296 = vsel %vm240, %v192, 0
      %v299 = vsel %vm240, %v193, 0
      %v302 = vsel %vm240, %v194, 0
      %v305 = vsel %vm240, %v195, 0
      %v308 = vsel %vm240, %v196, 0
      %v311 = vsel %vm240, %v197, 0
      %v314 = vsel %vm240, %v198, 0
      %v317 = vsel %vm240, %v199, 0
      %v320 = vsel %vm240, %v200, 0
      %v323 = vsel %vm240, %v201, 0
      %v326 = vsel %vm240, %v202, 0
      %v329 = vsel %vm240, %v203, 0
      %v332 = vsel %vm240, %v204, 0
      %v335 = vsel %vm240, %v205, 0
      %337 = vmatpush.msra.mxu0 0.0
      %338 = vmatpush.msra.mxu0 0.0
      %339 = vmatpush.msra.mxu0 0.0
      %340 = vmatpush.msra.mxu0 0.0
      %341 = vmatpush.msra.mxu0 0.0
      %342 = vmatpush.msra.mxu0 0.0
      %343 = vmatpush.msra.mxu0 0.0
      %344 = vmatpush.msra.mxu0 0.0
      %345 = vmatpush.msra.mxu0 0.0
      %346 = vmatpush.msra.mxu0 0.0
      %347 = vmatpush.msra.mxu0 0.0
      %348 = vmatpush.msra.mxu0 0.0
      %349 = vmatpush.msra.mxu0 0.0
      %350 = vmatpush.msra.mxu0 %v208
      %351 = vmatpush.msra.mxu0 %v207
      %352 = vmatpush.msra.mxu0 %v206
      %353 = vmatmul.f32.gmra.mxu0 %v242
      %v354 = vpop.f32.mrf.mxu0
      %v355 = vadd.f32 %v239, %v354
      %356 = vmatmul.f32.gmra.mxu0 %v245
      %v357 = vpop.f32.mrf.mxu0
      %v358 = vadd.f32 %v239, %v357
      %359 = vmatmul.f32.gmra.mxu0 %v248
      %v360 = vpop.f32.mrf.mxu0
      %v361 = vadd.f32 %v239, %v360
      %362 = vmatmul.f32.gmra.mxu0 %v251
      %v363 = vpop.f32.mrf.mxu0
      %v364 = vadd.f32 %v239, %v363
      %365 = vmatmul.f32.gmra.mxu0 %v254
      %v366 = vpop.f32.mrf.mxu0
      %v367 = vadd.f32 %v239, %v366
      %368 = vmatmul.f32.gmra.mxu0 %v257
      %v369 = vpop.f32.mrf.mxu0
      %v370 = vadd.f32 %v239, %v369
      %371 = vmatmul.f32.gmra.mxu0 %v260
      %v372 = vpop.f32.mrf.mxu0
      %v373 = vadd.f32 %v239, %v372
      %374 = vmatmul.f32.gmra.mxu0 %v263
      %v375 = vpop.f32.mrf.mxu0
      %v376 = vadd.f32 %v239, %v375
      %377 = vmatmul.f32.gmra.mxu0 %v266
      %v378 = vpop.f32.mrf.mxu0
      %v379 = vadd.f32 %v239, %v378
      %380 = vmatmul.f32.gmra.mxu0 %v269
      %v381 = vpop.f32.mrf.mxu0
      %v382 = vadd.f32 %v239, %v381
      %383 = vmatmul.f32.gmra.mxu0 %v272
      %v384 = vpop.f32.mrf.mxu0
      %v385 = vadd.f32 %v239, %v384
      %386 = vmatmul.f32.gmra.mxu0 %v275
      %v387 = vpop.f32.mrf.mxu0
      %v388 = vadd.f32 %v239, %v387
      %389 = vmatmul.f32.gmra.mxu0 %v278
      %v390 = vpop.f32.mrf.mxu0
      %v391 = vadd.f32 %v239, %v390
      %392 = vmatmul.f32.gmra.mxu0 %v281
      %v393 = vpop.f32.mrf.mxu0
      %v394 = vadd.f32 %v239, %v393
      %395 = vmatmul.f32.gmra.mxu0 %v284
      %v396 = vpop.f32.mrf.mxu0
      %v397 = vadd.f32 %v239, %v396
      %398 = vmatmul.f32.gmra.mxu0 %v287
      %v399 = vpop.f32.mrf.mxu0
      %v400 = vadd.f32 %v239, %v399
      %401 = vmatmul.f32.gmra.mxu0 %v290
      %v402 = vpop.f32.mrf.mxu0
      %v403 = vadd.f32 %v239, %v402
      %404 = vmatmul.f32.gmra.mxu0 %v293
      %v405 = vpop.f32.mrf.mxu0
      %v406 = vadd.f32 %v239, %v405
      %407 = vmatmul.f32.gmra.mxu0 %v296
      %v408 = vpop.f32.mrf.mxu0
      %v409 = vadd.f32 %v239, %v408
      %410 = vmatmul.f32.gmra.mxu0 %v299
      %v411 = vpop.f32.mrf.mxu0
      %v412 = vadd.f32 %v239, %v411
      %413 = vmatmul.f32.gmra.mxu0 %v302
      %v414 = vpop.f32.mrf.mxu0
      %v415 = vadd.f32 %v239, %v414
      %416 = vmatmul.f32.gmra.mxu0 %v305
      %v417 = vpop.f32.mrf.mxu0
      %v418 = vadd.f32 %v239, %v417
      %419 = vmatmul.f32.gmra.mxu0 %v308
      %v420 = vpop.f32.mrf.mxu0
      %v421 = vadd.f32 %v239, %v420
      %422 = vmatmul.f32.gmra.mxu0 %v311
      %v423 = vpop.f32.mrf.mxu0
      %v424 = vadd.f32 %v239, %v423
      %425 = vmatmul.f32.gmra.mxu0 %v314
      %v426 = vpop.f32.mrf.mxu0
      %v427 = vadd.f32 %v239, %v426
      %428 = vmatmul.f32.gmra.mxu0 %v317
      %v429 = vpop.f32.mrf.mxu0
      %v430 = vadd.f32 %v239, %v429
      %431 = vmatmul.f32.gmra.mxu0 %v320
      %v432 = vpop.f32.mrf.mxu0
      %v433 = vadd.f32 %v239, %v432
      %434 = vmatmul.f32.gmra.mxu0 %v323
      %v435 = vpop.f32.mrf.mxu0
      %v436 = vadd.f32 %v239, %v435
      %437 = vmatmul.f32.gmra.mxu0 %v326
      %v438 = vpop.f32.mrf.mxu0
      %v439 = vadd.f32 %v239, %v438
      %440 = vmatmul.f32.gmra.mxu0 %v329
      %v441 = vpop.f32.mrf.mxu0
      %v442 = vadd.f32 %v239, %v441
      %443 = vmatmul.f32.gmra.mxu0 %v332
      %v444 = vpop.f32.mrf.mxu0
      %v445 = vadd.f32 %v239, %v444
      %446 = vmatmul.f32.gmra.mxu0 %v335
      %v447 = vpop.f32.mrf.mxu0
      %v448 = vadd.f32 %v239, %v447
      %449 = vdwg.mxu0
      %v450 = vtanh.pop %v355
      %v451 = vtanh.pop %v358
      %v452 = vtanh.pop %v361
      %v453 = vtanh.pop %v364
      %v454 = vtanh.pop %v367
      %v455 = vtanh.pop %v370
      %v456 = vtanh.pop %v373
      %v457 = vtanh.pop %v376
      %v458 = vtanh.pop %v379
      %v459 = vtanh.pop %v382
      %v460 = vtanh.pop %v385
      %v461 = vtanh.pop %v388
      %v462 = vtanh.pop %v391
      %v463 = vtanh.pop %v394
      %v464 = vtanh.pop %v397
      %v465 = vtanh.pop %v400
      %v466 = vtanh.pop %v403
      %v467 = vtanh.pop %v406
      %v468 = vtanh.pop %v409
      %v469 = vtanh.pop %v412
      %v470 = vtanh.pop %v415
      %v471 = vtanh.pop %v418
      %v472 = vtanh.pop %v421
      %v473 = vtanh.pop %v424
      %v474 = vtanh.pop %v427
      %v475 = vtanh.pop %v430
      %v476 = vtanh.pop %v433
      %v477 = vtanh.pop %v436
      %v478 = vtanh.pop %v439
      %v479 = vtanh.pop %v442
      %v480 = vtanh.pop %v445
      %v481 = vtanh.pop %v448
      %v482 = vmul.f32 %v355, 0.1
      %v483 = vmul.f32 %v358, 0.1
      %v484 = vmul.f32 %v361, 0.1
      %v485 = vmul.f32 %v364, 0.1
      %v486 = vmul.f32 %v367, 0.1
      %v487 = vmul.f32 %v370, 0.1
      %v488 = vmul.f32 %v373, 0.1
      %v489 = vmul.f32 %v376, 0.1
      %v490 = vmul.f32 %v379, 0.1
      %v491 = vmul.f32 %v382, 0.1
      %v492 = vmul.f32 %v385, 0.1
      %v493 = vmul.f32 %v388, 0.1
      %v494 = vmul.f32 %v391, 0.1
      %v495 = vmul.f32 %v394, 0.1
      %v496 = vmul.f32 %v397, 0.1
      %v497 = vmul.f32 %v400, 0.1
      %v498 = vmul.f32 %v403, 0.1
      %v499 = vmul.f32 %v406, 0.1
      %v500 = vmul.f32 %v409, 0.1
      %v501 = vmul.f32 %v412, 0.1
      %v502 = vmul.f32 %v415, 0.1
      %v503 = vmul.f32 %v418, 0.1
      %v504 = vmul.f32 %v421, 0.1
      %v505 = vmul.f32 %v424, 0.1
      %v506 = vmul.f32 %v427, 0.1
      %v507 = vmul.f32 %v430, 0.1
      %v508 = vmul.f32 %v433, 0.1
      %v509 = vmul.f32 %v436, 0.1
      %v510 = vmul.f32 %v439, 0.1
      %v511 = vmul.f32 %v442, 0.1
      %v512 = vmul.f32 %v445, 0.1
      %v513 = vmul.f32 %v448, 0.1
      %v514 = vadd.f32 %v450, %v482
      %v515 = vadd.f32 %v451, %v483
      %v516 = vadd.f32 %v452, %v484
      %v517 = vadd.f32 %v453, %v485
      %v518 = vadd.f32 %v454, %v486
      %v519 = vadd.f32 %v455, %v487
      %v520 = vadd.f32 %v456, %v488
      %v521 = vadd.f32 %v457, %v489
      %v522 = vadd.f32 %v458, %v490
      %v523 = vadd.f32 %v459, %v491
      %v524 = vadd.f32 %v460, %v492
      %v525 = vadd.f32 %v461, %v493
      %v526 = vadd.f32 %v462, %v494
      %v527 = vadd.f32 %v463, %v495
      %v528 = vadd.f32 %v464, %v496
      %v529 = vadd.f32 %v465, %v497
      %v530 = vadd.f32 %v466, %v498
      %v531 = vadd.f32 %v467, %v499
      %v532 = vadd.f32 %v468, %v500
      %v533 = vadd.f32 %v469, %v501
      %v534 = vadd.f32 %v470, %v502
      %v535 = vadd.f32 %v471, %v503
      %v536 = vadd.f32 %v472, %v504
      %v537 = vadd.f32 %v473, %v505
      %v538 = vadd.f32 %v474, %v506
      %v539 = vadd.f32 %v475, %v507
      %v540 = vadd.f32 %v476, %v508
      %v541 = vadd.f32 %v477, %v509
      %v542 = vadd.f32 %v478, %v510
      %v543 = vadd.f32 %v479, %v511
      %v544 = vadd.f32 %v480, %v512
      %v545 = vadd.f32 %v481, %v513
      %v546 = vperm.slane %v234, 0
      %vm547 = vcmask 523264
      %v549 = vsel %vm547, %v514, 0
      %v552 = vsel %vm547, %v515, 0
      %v555 = vsel %vm547, %v516, 0
      %v558 = vsel %vm547, %v517, 0
      %v561 = vsel %vm547, %v518, 0
      %v564 = vsel %vm547, %v519, 0
      %v567 = vsel %vm547, %v520, 0
      %v570 = vsel %vm547, %v521, 0
      %v573 = vsel %vm547, %v522, 0
      %v576 = vsel %vm547, %v523, 0
      %v579 = vsel %vm547, %v524, 0
      %v582 = vsel %vm547, %v525, 0
      %v585 = vsel %vm547, %v526, 0
      %v588 = vsel %vm547, %v527, 0
      %v591 = vsel %vm547, %v528, 0
      %v594 = vsel %vm547, %v529, 0
      %v597 = vsel %vm547, %v530, 0
      %v600 = vsel %vm547, %v531, 0
      %v603 = vsel %vm547, %v532, 0
      %v606 = vsel %vm547, %v533, 0
      %v609 = vsel %vm547, %v534, 0
      %v612 = vsel %vm547, %v535, 0
      %v615 = vsel %vm547, %v536, 0
      %v618 = vsel %vm547, %v537, 0
      %v621 = vsel %vm547, %v538, 0
      %v624 = vsel %vm547, %v539, 0
      %v627 = vsel %vm547, %v540, 0
      %v630 = vsel %vm547, %v541, 0
      %v633 = vsel %vm547, %v542, 0
      %v636 = vsel %vm547, %v543, 0
      %v639 = vsel %vm547, %v544, 0
      %v642 = vsel %vm547, %v545, 0
      %644 = vmatpush.msra.mxu0 0.0
      %645 = vmatpush.msra.mxu0 0.0
      %646 = vmatpush.msra.mxu0 0.0
      %647 = vmatpush.msra.mxu0 0.0
      %648 = vmatpush.msra.mxu0 0.0
      %649 = vmatpush.msra.mxu0 0.0
      %650 = vmatpush.msra.mxu0 0.0
      %651 = vmatpush.msra.mxu0 0.0
      %652 = vmatpush.msra.mxu0 %v216
      %653 = vmatpush.msra.mxu0 %v215
      %654 = vmatpush.msra.mxu0 %v214
      %655 = vmatpush.msra.mxu0 %v213
      %656 = vmatpush.msra.mxu0 %v212
      %657 = vmatpush.msra.mxu0 %v211
      %658 = vmatpush.msra.mxu0 %v210
      %659 = vmatpush.msra.mxu0 %v209
      %660 = vmatmul.f32.gmra.mxu0 %v549
      %v661 = vpop.f32.mrf.mxu0
      %v662 = vadd.f32 %v546, %v661
      %663 = vmatmul.f32.gmra.mxu0 %v552
      %v664 = vpop.f32.mrf.mxu0
      %v665 = vadd.f32 %v546, %v664
      %666 = vmatmul.f32.gmra.mxu0 %v555
      %v667 = vpop.f32.mrf.mxu0
      %v668 = vadd.f32 %v546, %v667
      %669 = vmatmul.f32.gmra.mxu0 %v558
      %v670 = vpop.f32.mrf.mxu0
      %v671 = vadd.f32 %v546, %v670
      %672 = vmatmul.f32.gmra.mxu0 %v561
      %v673 = vpop.f32.mrf.mxu0
      %v674 = vadd.f32 %v546, %v673
      %675 = vmatmul.f32.gmra.mxu0 %v564
      %v676 = vpop.f32.mrf.mxu0
      %v677 = vadd.f32 %v546, %v676
      %678 = vmatmul.f32.gmra.mxu0 %v567
      %v679 = vpop.f32.mrf.mxu0
      %v680 = vadd.f32 %v546, %v679
      %681 = vmatmul.f32.gmra.mxu0 %v570
      %v682 = vpop.f32.mrf.mxu0
      %v683 = vadd.f32 %v546, %v682
      %684 = vmatmul.f32.gmra.mxu0 %v573
      %v685 = vpop.f32.mrf.mxu0
      %v686 = vadd.f32 %v546, %v685
      %687 = vmatmul.f32.gmra.mxu0 %v576
      %v688 = vpop.f32.mrf.mxu0
      %v689 = vadd.f32 %v546, %v688
      %690 = vmatmul.f32.gmra.mxu0 %v579
      %v691 = vpop.f32.mrf.mxu0
      %v692 = vadd.f32 %v546, %v691
      %693 = vmatmul.f32.gmra.mxu0 %v582
      %v694 = vpop.f32.mrf.mxu0
      %v695 = vadd.f32 %v546, %v694
      %696 = vmatmul.f32.gmra.mxu0 %v585
      %v697 = vpop.f32.mrf.mxu0
      %v698 = vadd.f32 %v546, %v697
      %699 = vmatmul.f32.gmra.mxu0 %v588
      %v700 = vpop.f32.mrf.mxu0
      %v701 = vadd.f32 %v546, %v700
      %702 = vmatmul.f32.gmra.mxu0 %v591
      %v703 = vpop.f32.mrf.mxu0
      %v704 = vadd.f32 %v546, %v703
      %705 = vmatmul.f32.gmra.mxu0 %v594
      %v706 = vpop.f32.mrf.mxu0
      %v707 = vadd.f32 %v546, %v706
      %708 = vmatmul.f32.gmra.mxu0 %v597
      %v709 = vpop.f32.mrf.mxu0
      %v710 = vadd.f32 %v546, %v709
      %711 = vmatmul.f32.gmra.mxu0 %v600
      %v712 = vpop.f32.mrf.mxu0
      %v713 = vadd.f32 %v546, %v712
      %714 = vmatmul.f32.gmra.mxu0 %v603
      %v715 = vpop.f32.mrf.mxu0
      %v716 = vadd.f32 %v546, %v715
      %717 = vmatmul.f32.gmra.mxu0 %v606
      %v718 = vpop.f32.mrf.mxu0
      %v719 = vadd.f32 %v546, %v718
      %720 = vmatmul.f32.gmra.mxu0 %v609
      %v721 = vpop.f32.mrf.mxu0
      %v722 = vadd.f32 %v546, %v721
      %723 = vmatmul.f32.gmra.mxu0 %v612
      %v724 = vpop.f32.mrf.mxu0
      %v725 = vadd.f32 %v546, %v724
      %726 = vmatmul.f32.gmra.mxu0 %v615
      %v727 = vpop.f32.mrf.mxu0
      %v728 = vadd.f32 %v546, %v727
      %729 = vmatmul.f32.gmra.mxu0 %v618
      %v730 = vpop.f32.mrf.mxu0
      %v731 = vadd.f32 %v546, %v730
      %732 = vmatmul.f32.gmra.mxu0 %v621
      %v733 = vpop.f32.mrf.mxu0
      %v734 = vadd.f32 %v546, %v733
      %735 = vmatmul.f32.gmra.mxu0 %v624
      %v736 = vpop.f32.mrf.mxu0
      %v737 = vadd.f32 %v546, %v736
      %738 = vmatmul.f32.gmra.mxu0 %v627
      %v739 = vpop.f32.mrf.mxu0
      %v740 = vadd.f32 %v546, %v739
      %741 = vmatmul.f32.gmra.mxu0 %v630
      %v742 = vpop.f32.mrf.mxu0
      %v743 = vadd.f32 %v546, %v742
      %744 = vmatmul.f32.gmra.mxu0 %v633
      %v745 = vpop.f32.mrf.mxu0
      %v746 = vadd.f32 %v546, %v745
      %747 = vmatmul.f32.gmra.mxu0 %v636
      %v748 = vpop.f32.mrf.mxu0
      %v749 = vadd.f32 %v546, %v748
      %750 = vmatmul.f32.gmra.mxu0 %v639
      %v751 = vpop.f32.mrf.mxu0
      %v752 = vadd.f32 %v546, %v751
      %753 = vmatmul.f32.gmra.mxu0 %v642
      %v754 = vpop.f32.mrf.mxu0
      %v755 = vadd.f32 %v546, %v754
      %756 = vdwg.mxu0
      %v757 = vperm.slane %v235, 0
      %v759 = vsel %vm240, %v662, 0
      %v762 = vsel %vm240, %v665, 0
      %v765 = vsel %vm240, %v668, 0
      %v768 = vsel %vm240, %v671, 0
      %v771 = vsel %vm240, %v674, 0
      %v774 = vsel %vm240, %v677, 0
      %v777 = vsel %vm240, %v680, 0
      %v780 = vsel %vm240, %v683, 0
      %v783 = vsel %vm240, %v686, 0
      %v786 = vsel %vm240, %v689, 0
      %v789 = vsel %vm240, %v692, 0
      %v792 = vsel %vm240, %v695, 0
      %v795 = vsel %vm240, %v698, 0
      %v798 = vsel %vm240, %v701, 0
      %v801 = vsel %vm240, %v704, 0
      %v804 = vsel %vm240, %v707, 0
      %v807 = vsel %vm240, %v710, 0
      %v810 = vsel %vm240, %v713, 0
      %v813 = vsel %vm240, %v716, 0
      %v816 = vsel %vm240, %v719, 0
      %v819 = vsel %vm240, %v722, 0
      %v822 = vsel %vm240, %v725, 0
      %v825 = vsel %vm240, %v728, 0
      %v828 = vsel %vm240, %v731, 0
      %v831 = vsel %vm240, %v734, 0
      %v834 = vsel %vm240, %v737, 0
      %v837 = vsel %vm240, %v740, 0
      %v840 = vsel %vm240, %v743, 0
      %v843 = vsel %vm240, %v746, 0
      %v846 = vsel %vm240, %v749, 0
      %v849 = vsel %vm240, %v752, 0
      %v852 = vsel %vm240, %v755, 0
      %854 = vmatpush.msra.mxu0 0.0
      %855 = vmatpush.msra.mxu0 0.0
      %856 = vmatpush.msra.mxu0 0.0
      %857 = vmatpush.msra.mxu0 0.0
      %858 = vmatpush.msra.mxu0 0.0
      %859 = vmatpush.msra.mxu0 0.0
      %860 = vmatpush.msra.mxu0 0.0
      %861 = vmatpush.msra.mxu0 0.0
      %862 = vmatpush.msra.mxu0 0.0
      %863 = vmatpush.msra.mxu0 0.0
      %864 = vmatpush.msra.mxu0 0.0
      %865 = vmatpush.msra.mxu0 0.0
      %866 = vmatpush.msra.mxu0 0.0
      %867 = vmatpush.msra.mxu0 %v219
      %868 = vmatpush.msra.mxu0 %v218
      %869 = vmatpush.msra.mxu0 %v217
      %870 = vmatmul.f32.gmra.mxu0 %v759
      %v871 = vpop.f32.mrf.mxu0
      %v872 = vadd.f32 %v757, %v871
      %873 = vmatmul.f32.gmra.mxu0 %v762
      %v874 = vpop.f32.mrf.mxu0
      %v875 = vadd.f32 %v757, %v874
      %876 = vmatmul.f32.gmra.mxu0 %v765
      %v877 = vpop.f32.mrf.mxu0
      %v878 = vadd.f32 %v757, %v877
      %879 = vmatmul.f32.gmra.mxu0 %v768
      %v880 = vpop.f32.mrf.mxu0
      %v881 = vadd.f32 %v757, %v880
      %882 = vmatmul.f32.gmra.mxu0 %v771
      %v883 = vpop.f32.mrf.mxu0
      %v884 = vadd.f32 %v757, %v883
      %885 = vmatmul.f32.gmra.mxu0 %v774
      %v886 = vpop.f32.mrf.mxu0
      %v887 = vadd.f32 %v757, %v886
      %888 = vmatmul.f32.gmra.mxu0 %v777
      %v889 = vpop.f32.mrf.mxu0
      %v890 = vadd.f32 %v757, %v889
      %891 = vmatmul.f32.gmra.mxu0 %v780
      %v892 = vpop.f32.mrf.mxu0
      %v893 = vadd.f32 %v757, %v892
      %894 = vmatmul.f32.gmra.mxu0 %v783
      %v895 = vpop.f32.mrf.mxu0
      %v896 = vadd.f32 %v757, %v895
      %897 = vmatmul.f32.gmra.mxu0 %v786
      %v898 = vpop.f32.mrf.mxu0
      %v899 = vadd.f32 %v757, %v898
      %900 = vmatmul.f32.gmra.mxu0 %v789
      %v901 = vpop.f32.mrf.mxu0
      %v902 = vadd.f32 %v757, %v901
      %903 = vmatmul.f32.gmra.mxu0 %v792
      %v904 = vpop.f32.mrf.mxu0
      %v905 = vadd.f32 %v757, %v904
      %906 = vmatmul.f32.gmra.mxu0 %v795
      %v907 = vpop.f32.mrf.mxu0
      %v908 = vadd.f32 %v757, %v907
      %909 = vmatmul.f32.gmra.mxu0 %v798
      %v910 = vpop.f32.mrf.mxu0
      %v911 = vadd.f32 %v757, %v910
      %912 = vmatmul.f32.gmra.mxu0 %v801
      %v913 = vpop.f32.mrf.mxu0
      %v914 = vadd.f32 %v757, %v913
      %915 = vmatmul.f32.gmra.mxu0 %v804
      %v916 = vpop.f32.mrf.mxu0
      %v917 = vadd.f32 %v757, %v916
      %918 = vmatmul.f32.gmra.mxu0 %v807
      %v919 = vpop.f32.mrf.mxu0
      %v920 = vadd.f32 %v757, %v919
      %921 = vmatmul.f32.gmra.mxu0 %v810
      %v922 = vpop.f32.mrf.mxu0
      %v923 = vadd.f32 %v757, %v922
      %924 = vmatmul.f32.gmra.mxu0 %v813
      %v925 = vpop.f32.mrf.mxu0
      %v926 = vadd.f32 %v757, %v925
      %927 = vmatmul.f32.gmra.mxu0 %v816
      %v928 = vpop.f32.mrf.mxu0
      %v929 = vadd.f32 %v757, %v928
      %930 = vmatmul.f32.gmra.mxu0 %v819
      %v931 = vpop.f32.mrf.mxu0
      %v932 = vadd.f32 %v757, %v931
      %933 = vmatmul.f32.gmra.mxu0 %v822
      %v934 = vpop.f32.mrf.mxu0
      %v935 = vadd.f32 %v757, %v934
      %936 = vmatmul.f32.gmra.mxu0 %v825
      %v937 = vpop.f32.mrf.mxu0
      %v938 = vadd.f32 %v757, %v937
      %939 = vmatmul.f32.gmra.mxu0 %v828
      %v940 = vpop.f32.mrf.mxu0
      %v941 = vadd.f32 %v757, %v940
      %942 = vmatmul.f32.gmra.mxu0 %v831
      %v943 = vpop.f32.mrf.mxu0
      %v944 = vadd.f32 %v757, %v943
      %945 = vmatmul.f32.gmra.mxu0 %v834
      %v946 = vpop.f32.mrf.mxu0
      %v947 = vadd.f32 %v757, %v946
      %948 = vmatmul.f32.gmra.mxu0 %v837
      %v949 = vpop.f32.mrf.mxu0
      %v950 = vadd.f32 %v757, %v949
      %951 = vmatmul.f32.gmra.mxu0 %v840
      %v952 = vpop.f32.mrf.mxu0
      %v953 = vadd.f32 %v757, %v952
      %954 = vmatmul.f32.gmra.mxu0 %v843
      %v955 = vpop.f32.mrf.mxu0
      %v956 = vadd.f32 %v757, %v955
      %957 = vmatmul.f32.gmra.mxu0 %v846
      %v958 = vpop.f32.mrf.mxu0
      %v959 = vadd.f32 %v757, %v958
      %960 = vmatmul.f32.gmra.mxu0 %v849
      %v961 = vpop.f32.mrf.mxu0
      %v962 = vadd.f32 %v757, %v961
      %963 = vmatmul.f32.gmra.mxu0 %v852
      %v964 = vpop.f32.mrf.mxu0
      %v965 = vadd.f32 %v757, %v964
      %966 = vdwg.mxu0
      %v967 = vtanh.pop %v872
      %v968 = vtanh.pop %v875
      %v969 = vtanh.pop %v878
      %v970 = vtanh.pop %v881
      %v971 = vtanh.pop %v884
      %v972 = vtanh.pop %v887
      %v973 = vtanh.pop %v890
      %v974 = vtanh.pop %v893
      %v975 = vtanh.pop %v896
      %v976 = vtanh.pop %v899
      %v977 = vtanh.pop %v902
      %v978 = vtanh.pop %v905
      %v979 = vtanh.pop %v908
      %v980 = vtanh.pop %v911
      %v981 = vtanh.pop %v914
      %v982 = vtanh.pop %v917
      %v983 = vtanh.pop %v920
      %v984 = vtanh.pop %v923
      %v985 = vtanh.pop %v926
      %v986 = vtanh.pop %v929
      %v987 = vtanh.pop %v932
      %v988 = vtanh.pop %v935
      %v989 = vtanh.pop %v938
      %v990 = vtanh.pop %v941
      %v991 = vtanh.pop %v944
      %v992 = vtanh.pop %v947
      %v993 = vtanh.pop %v950
      %v994 = vtanh.pop %v953
      %v995 = vtanh.pop %v956
      %v996 = vtanh.pop %v959
      %v997 = vtanh.pop %v962
      %v998 = vtanh.pop %v965
      %v999 = vmul.f32 %v872, 0.1
      %v1000 = vmul.f32 %v875, 0.1
      %v1001 = vmul.f32 %v878, 0.1
      %v1002 = vmul.f32 %v881, 0.1
      %v1003 = vmul.f32 %v884, 0.1
      %v1004 = vmul.f32 %v887, 0.1
      %v1005 = vmul.f32 %v890, 0.1
      %v1006 = vmul.f32 %v893, 0.1
      %v1007 = vmul.f32 %v896, 0.1
      %v1008 = vmul.f32 %v899, 0.1
      %v1009 = vmul.f32 %v902, 0.1
      %v1010 = vmul.f32 %v905, 0.1
      %v1011 = vmul.f32 %v908, 0.1
      %v1012 = vmul.f32 %v911, 0.1
      %v1013 = vmul.f32 %v914, 0.1
      %v1014 = vmul.f32 %v917, 0.1
      %v1015 = vmul.f32 %v920, 0.1
      %v1016 = vmul.f32 %v923, 0.1
      %v1017 = vmul.f32 %v926, 0.1
      %v1018 = vmul.f32 %v929, 0.1
      %v1019 = vmul.f32 %v932, 0.1
      %v1020 = vmul.f32 %v935, 0.1
      %v1021 = vmul.f32 %v938, 0.1
      %v1022 = vmul.f32 %v941, 0.1
      %v1023 = vmul.f32 %v944, 0.1
      %v1024 = vmul.f32 %v947, 0.1
      %v1025 = vmul.f32 %v950, 0.1
      %v1026 = vmul.f32 %v953, 0.1
      %v1027 = vmul.f32 %v956, 0.1
      %v1028 = vmul.f32 %v959, 0.1
      %v1029 = vmul.f32 %v962, 0.1
      %v1030 = vmul.f32 %v965, 0.1
      %v1031 = vadd.f32 %v967, %v999
      %v1032 = vadd.f32 %v968, %v1000
      %v1033 = vadd.f32 %v969, %v1001
      %v1034 = vadd.f32 %v970, %v1002
      %v1035 = vadd.f32 %v971, %v1003
      %v1036 = vadd.f32 %v972, %v1004
      %v1037 = vadd.f32 %v973, %v1005
      %v1038 = vadd.f32 %v974, %v1006
      %v1039 = vadd.f32 %v975, %v1007
      %v1040 = vadd.f32 %v976, %v1008
      %v1041 = vadd.f32 %v977, %v1009
      %v1042 = vadd.f32 %v978, %v1010
      %v1043 = vadd.f32 %v979, %v1011
      %v1044 = vadd.f32 %v980, %v1012
      %v1045 = vadd.f32 %v981, %v1013
      %v1046 = vadd.f32 %v982, %v1014
      %v1047 = vadd.f32 %v983, %v1015
      %v1048 = vadd.f32 %v984, %v1016
      %v1049 = vadd.f32 %v985, %v1017
      %v1050 = vadd.f32 %v986, %v1018
      %v1051 = vadd.f32 %v987, %v1019
      %v1052 = vadd.f32 %v988, %v1020
      %v1053 = vadd.f32 %v989, %v1021
      %v1054 = vadd.f32 %v990, %v1022
      %v1055 = vadd.f32 %v991, %v1023
      %v1056 = vadd.f32 %v992, %v1024
      %v1057 = vadd.f32 %v993, %v1025
      %v1058 = vadd.f32 %v994, %v1026
      %v1059 = vadd.f32 %v995, %v1027
      %v1060 = vadd.f32 %v996, %v1028
      %v1061 = vadd.f32 %v997, %v1029
      %v1062 = vadd.f32 %v998, %v1030
      %v1063 = vperm.slane %v236, 0
      %v1065 = vsel %vm547, %v1031, 0
      %v1068 = vsel %vm547, %v1032, 0
      %v1071 = vsel %vm547, %v1033, 0
      %v1074 = vsel %vm547, %v1034, 0
      %v1077 = vsel %vm547, %v1035, 0
      %v1080 = vsel %vm547, %v1036, 0
      %v1083 = vsel %vm547, %v1037, 0
      %v1086 = vsel %vm547, %v1038, 0
      %v1089 = vsel %vm547, %v1039, 0
      %v1092 = vsel %vm547, %v1040, 0
      %v1095 = vsel %vm547, %v1041, 0
      %v1098 = vsel %vm547, %v1042, 0
      %v1101 = vsel %vm547, %v1043, 0
      %v1104 = vsel %vm547, %v1044, 0
      %v1107 = vsel %vm547, %v1045, 0
      %v1110 = vsel %vm547, %v1046, 0
      %v1113 = vsel %vm547, %v1047, 0
      %v1116 = vsel %vm547, %v1048, 0
      %v1119 = vsel %vm547, %v1049, 0
      %v1122 = vsel %vm547, %v1050, 0
      %v1125 = vsel %vm547, %v1051, 0
      %v1128 = vsel %vm547, %v1052, 0
      %v1131 = vsel %vm547, %v1053, 0
      %v1134 = vsel %vm547, %v1054, 0
      %v1137 = vsel %vm547, %v1055, 0
      %v1140 = vsel %vm547, %v1056, 0
      %v1143 = vsel %vm547, %v1057, 0
      %v1146 = vsel %vm547, %v1058, 0
      %v1149 = vsel %vm547, %v1059, 0
      %v1152 = vsel %vm547, %v1060, 0
      %v1155 = vsel %vm547, %v1061, 0
      %v1158 = vsel %vm547, %v1062, 0
      %1160 = vmatpush.msra.mxu0 0.0
      %1161 = vmatpush.msra.mxu0 0.0
      %1162 = vmatpush.msra.mxu0 0.0
      %1163 = vmatpush.msra.mxu0 0.0
      %1164 = vmatpush.msra.mxu0 0.0
      %1165 = vmatpush.msra.mxu0 0.0
      %1166 = vmatpush.msra.mxu0 0.0
      %1167 = vmatpush.msra.mxu0 0.0
      %1168 = vmatpush.msra.mxu0 %v227
      %1169 = vmatpush.msra.mxu0 %v226
      %1170 = vmatpush.msra.mxu0 %v225
      %1171 = vmatpush.msra.mxu0 %v224
      %1172 = vmatpush.msra.mxu0 %v223
      %1173 = vmatpush.msra.mxu0 %v222
      %1174 = vmatpush.msra.mxu0 %v221
      %1175 = vmatpush.msra.mxu0 %v220
      %1176 = vmatmul.f32.gmra.mxu0 %v1065
      %v1177 = vpop.f32.mrf.mxu0
      %v1178 = vadd.f32 %v1063, %v1177
      %1179 = vmatmul.f32.gmra.mxu0 %v1068
      %v1180 = vpop.f32.mrf.mxu0
      %v1181 = vadd.f32 %v1063, %v1180
      %1182 = vmatmul.f32.gmra.mxu0 %v1071
      %v1183 = vpop.f32.mrf.mxu0
      %v1184 = vadd.f32 %v1063, %v1183
      %1185 = vmatmul.f32.gmra.mxu0 %v1074
      %v1186 = vpop.f32.mrf.mxu0
      %v1187 = vadd.f32 %v1063, %v1186
      %1188 = vmatmul.f32.gmra.mxu0 %v1077
      %v1189 = vpop.f32.mrf.mxu0
      %v1190 = vadd.f32 %v1063, %v1189
      %1191 = vmatmul.f32.gmra.mxu0 %v1080
      %v1192 = vpop.f32.mrf.mxu0
      %v1193 = vadd.f32 %v1063, %v1192
      %1194 = vmatmul.f32.gmra.mxu0 %v1083
      %v1195 = vpop.f32.mrf.mxu0
      %v1196 = vadd.f32 %v1063, %v1195
      %1197 = vmatmul.f32.gmra.mxu0 %v1086
      %v1198 = vpop.f32.mrf.mxu0
      %v1199 = vadd.f32 %v1063, %v1198
      %1200 = vmatmul.f32.gmra.mxu0 %v1089
      %v1201 = vpop.f32.mrf.mxu0
      %v1202 = vadd.f32 %v1063, %v1201
      %1203 = vmatmul.f32.gmra.mxu0 %v1092
      %v1204 = vpop.f32.mrf.mxu0
      %v1205 = vadd.f32 %v1063, %v1204
      %1206 = vmatmul.f32.gmra.mxu0 %v1095
      %v1207 = vpop.f32.mrf.mxu0
      %v1208 = vadd.f32 %v1063, %v1207
      %1209 = vmatmul.f32.gmra.mxu0 %v1098
      %v1210 = vpop.f32.mrf.mxu0
      %v1211 = vadd.f32 %v1063, %v1210
      %1212 = vmatmul.f32.gmra.mxu0 %v1101
      %v1213 = vpop.f32.mrf.mxu0
      %v1214 = vadd.f32 %v1063, %v1213
      %1215 = vmatmul.f32.gmra.mxu0 %v1104
      %v1216 = vpop.f32.mrf.mxu0
      %v1217 = vadd.f32 %v1063, %v1216
      %1218 = vmatmul.f32.gmra.mxu0 %v1107
      %v1219 = vpop.f32.mrf.mxu0
      %v1220 = vadd.f32 %v1063, %v1219
      %1221 = vmatmul.f32.gmra.mxu0 %v1110
      %v1222 = vpop.f32.mrf.mxu0
      %v1223 = vadd.f32 %v1063, %v1222
      %1224 = vmatmul.f32.gmra.mxu0 %v1113
      %v1225 = vpop.f32.mrf.mxu0
      %v1226 = vadd.f32 %v1063, %v1225
      %1227 = vmatmul.f32.gmra.mxu0 %v1116
      %v1228 = vpop.f32.mrf.mxu0
      %v1229 = vadd.f32 %v1063, %v1228
      %1230 = vmatmul.f32.gmra.mxu0 %v1119
      %v1231 = vpop.f32.mrf.mxu0
      %v1232 = vadd.f32 %v1063, %v1231
      %1233 = vmatmul.f32.gmra.mxu0 %v1122
      %v1234 = vpop.f32.mrf.mxu0
      %v1235 = vadd.f32 %v1063, %v1234
      %1236 = vmatmul.f32.gmra.mxu0 %v1125
      %v1237 = vpop.f32.mrf.mxu0
      %v1238 = vadd.f32 %v1063, %v1237
      %1239 = vmatmul.f32.gmra.mxu0 %v1128
      %v1240 = vpop.f32.mrf.mxu0
      %v1241 = vadd.f32 %v1063, %v1240
      %1242 = vmatmul.f32.gmra.mxu0 %v1131
      %v1243 = vpop.f32.mrf.mxu0
      %v1244 = vadd.f32 %v1063, %v1243
      %1245 = vmatmul.f32.gmra.mxu0 %v1134
      %v1246 = vpop.f32.mrf.mxu0
      %v1247 = vadd.f32 %v1063, %v1246
      %1248 = vmatmul.f32.gmra.mxu0 %v1137
      %v1249 = vpop.f32.mrf.mxu0
      %v1250 = vadd.f32 %v1063, %v1249
      %1251 = vmatmul.f32.gmra.mxu0 %v1140
      %v1252 = vpop.f32.mrf.mxu0
      %v1253 = vadd.f32 %v1063, %v1252
      %1254 = vmatmul.f32.gmra.mxu0 %v1143
      %v1255 = vpop.f32.mrf.mxu0
      %v1256 = vadd.f32 %v1063, %v1255
      %1257 = vmatmul.f32.gmra.mxu0 %v1146
      %v1258 = vpop.f32.mrf.mxu0
      %v1259 = vadd.f32 %v1063, %v1258
      %1260 = vmatmul.f32.gmra.mxu0 %v1149
      %v1261 = vpop.f32.mrf.mxu0
      %v1262 = vadd.f32 %v1063, %v1261
      %1263 = vmatmul.f32.gmra.mxu0 %v1152
      %v1264 = vpop.f32.mrf.mxu0
      %v1265 = vadd.f32 %v1063, %v1264
      %1266 = vmatmul.f32.gmra.mxu0 %v1155
      %v1267 = vpop.f32.mrf.mxu0
      %v1268 = vadd.f32 %v1063, %v1267
      %1269 = vmatmul.f32.gmra.mxu0 %v1158
      %v1270 = vpop.f32.mrf.mxu0
      %v1271 = vadd.f32 %v1063, %v1270
      %1272 = vdwg.mxu0
      %v1273 = vmul.f32 %v1178, 0.5
      %v1274 = vmul.f32 %v1181, 0.5
      %v1275 = vmul.f32 %v1184, 0.5
      %v1276 = vmul.f32 %v1187, 0.5
      %v1277 = vmul.f32 %v1190, 0.5
      %v1278 = vmul.f32 %v1193, 0.5
      %v1279 = vmul.f32 %v1196, 0.5
      %v1280 = vmul.f32 %v1199, 0.5
      %v1281 = vmul.f32 %v1202, 0.5
      %v1282 = vmul.f32 %v1205, 0.5
      %v1283 = vmul.f32 %v1208, 0.5
      %v1284 = vmul.f32 %v1211, 0.5
      %v1285 = vmul.f32 %v1214, 0.5
      %v1286 = vmul.f32 %v1217, 0.5
      %v1287 = vmul.f32 %v1220, 0.5
      %v1288 = vmul.f32 %v1223, 0.5
      %v1289 = vmul.f32 %v1226, 0.5
      %v1290 = vmul.f32 %v1229, 0.5
      %v1291 = vmul.f32 %v1232, 0.5
      %v1292 = vmul.f32 %v1235, 0.5
      %v1293 = vmul.f32 %v1238, 0.5
      %v1294 = vmul.f32 %v1241, 0.5
      %v1295 = vmul.f32 %v1244, 0.5
      %v1296 = vmul.f32 %v1247, 0.5
      %v1297 = vmul.f32 %v1250, 0.5
      %v1298 = vmul.f32 %v1253, 0.5
      %v1299 = vmul.f32 %v1256, 0.5
      %v1300 = vmul.f32 %v1259, 0.5
      %v1301 = vmul.f32 %v1262, 0.5
      %v1302 = vmul.f32 %v1265, 0.5
      %v1303 = vmul.f32 %v1268, 0.5
      %v1304 = vmul.f32 %v1271, 0.5
      %v1305 = vmul.f32 %v1273, 1.442695
      %v1306 = vpow.pop %v1305
      %v1307 = vmul.f32 %v1274, 1.442695
      %v1308 = vpow.pop %v1307
      %v1309 = vmul.f32 %v1275, 1.442695
      %v1310 = vpow.pop %v1309
      %v1311 = vmul.f32 %v1276, 1.442695
      %v1312 = vpow.pop %v1311
      %v1313 = vmul.f32 %v1277, 1.442695
      %v1314 = vpow.pop %v1313
      %v1315 = vmul.f32 %v1278, 1.442695
      %v1316 = vpow.pop %v1315
      %v1317 = vmul.f32 %v1279, 1.442695
      %v1318 = vpow.pop %v1317
      %v1319 = vmul.f32 %v1280, 1.442695
      %v1320 = vpow.pop %v1319
      %v1321 = vmul.f32 %v1281, 1.442695
      %v1322 = vpow.pop %v1321
      %v1323 = vmul.f32 %v1282, 1.442695
      %v1324 = vpow.pop %v1323
      %v1325 = vmul.f32 %v1283, 1.442695
      %v1326 = vpow.pop %v1325
      %v1327 = vmul.f32 %v1284, 1.442695
      %v1328 = vpow.pop %v1327
      %v1329 = vmul.f32 %v1285, 1.442695
      %v1330 = vpow.pop %v1329
      %v1331 = vmul.f32 %v1286, 1.442695
      %v1332 = vpow.pop %v1331
      %v1333 = vmul.f32 %v1287, 1.442695
      %v1334 = vpow.pop %v1333
      %v1335 = vmul.f32 %v1288, 1.442695
      %v1336 = vpow.pop %v1335
      %v1337 = vmul.f32 %v1289, 1.442695
      %v1338 = vpow.pop %v1337
      %v1339 = vmul.f32 %v1290, 1.442695
      %v1340 = vpow.pop %v1339
      %v1341 = vmul.f32 %v1291, 1.442695
      %v1342 = vpow.pop %v1341
      %v1343 = vmul.f32 %v1292, 1.442695
      %v1344 = vpow.pop %v1343
      %v1345 = vmul.f32 %v1293, 1.442695
      %v1346 = vpow.pop %v1345
      %v1347 = vmul.f32 %v1294, 1.442695
      %v1348 = vpow.pop %v1347
      %v1349 = vmul.f32 %v1295, 1.442695
      %v1350 = vpow.pop %v1349
      %v1351 = vmul.f32 %v1296, 1.442695
      %v1352 = vpow.pop %v1351
      %v1353 = vmul.f32 %v1297, 1.442695
      %v1354 = vpow.pop %v1353
      %v1355 = vmul.f32 %v1298, 1.442695
      %v1356 = vpow.pop %v1355
      %v1357 = vmul.f32 %v1299, 1.442695
      %v1358 = vpow.pop %v1357
      %v1359 = vmul.f32 %v1300, 1.442695
      %v1360 = vpow.pop %v1359
      %v1361 = vmul.f32 %v1301, 1.442695
      %v1362 = vpow.pop %v1361
      %v1363 = vmul.f32 %v1302, 1.442695
      %v1364 = vpow.pop %v1363
      %v1365 = vmul.f32 %v1303, 1.442695
      %v1366 = vpow.pop %v1365
      %v1367 = vmul.f32 %v1304, 1.442695
      %v1368 = vpow.pop %v1367
      %v1369 = vmul.f32 %v1306, %v1306
      %v1370 = vmul.f32 %v1308, %v1308
      %v1371 = vmul.f32 %v1310, %v1310
      %v1372 = vmul.f32 %v1312, %v1312
      %v1373 = vmul.f32 %v1314, %v1314
      %v1374 = vmul.f32 %v1316, %v1316
      %v1375 = vmul.f32 %v1318, %v1318
      %v1376 = vmul.f32 %v1320, %v1320
      %v1377 = vmul.f32 %v1322, %v1322
      %v1378 = vmul.f32 %v1324, %v1324
      %v1379 = vmul.f32 %v1326, %v1326
      %v1380 = vmul.f32 %v1328, %v1328
      %v1381 = vmul.f32 %v1330, %v1330
      %v1382 = vmul.f32 %v1332, %v1332
      %v1383 = vmul.f32 %v1334, %v1334
      %v1384 = vmul.f32 %v1336, %v1336
      %v1385 = vmul.f32 %v1338, %v1338
      %v1386 = vmul.f32 %v1340, %v1340
      %v1387 = vmul.f32 %v1342, %v1342
      %v1388 = vmul.f32 %v1344, %v1344
      %v1389 = vmul.f32 %v1346, %v1346
      %v1390 = vmul.f32 %v1348, %v1348
      %v1391 = vmul.f32 %v1350, %v1350
      %v1392 = vmul.f32 %v1352, %v1352
      %v1393 = vmul.f32 %v1354, %v1354
      %v1394 = vmul.f32 %v1356, %v1356
      %v1395 = vmul.f32 %v1358, %v1358
      %v1396 = vmul.f32 %v1360, %v1360
      %v1397 = vmul.f32 %v1362, %v1362
      %v1398 = vmul.f32 %v1364, %v1364
      %v1399 = vmul.f32 %v1366, %v1366
      %v1400 = vmul.f32 %v1368, %v1368
      %1433 = vrot.lane.b32.xlu0 %v1306, 16
      %v1434 = vpop.permute.xlu0 %1433
      %1435 = vrot.lane.b32.xlu0 %v1308, 16
      %v1436 = vpop.permute.xlu0 %1435
      %1437 = vrot.lane.b32.xlu0 %v1310, 16
      %v1438 = vpop.permute.xlu0 %1437
      %1439 = vrot.lane.b32.xlu0 %v1312, 16
      %v1440 = vpop.permute.xlu0 %1439
      %1441 = vrot.lane.b32.xlu0 %v1314, 16
      %v1442 = vpop.permute.xlu0 %1441
      %1443 = vrot.lane.b32.xlu0 %v1316, 16
      %v1444 = vpop.permute.xlu0 %1443
      %1445 = vrot.lane.b32.xlu0 %v1318, 16
      %v1446 = vpop.permute.xlu0 %1445
      %1447 = vrot.lane.b32.xlu0 %v1320, 16
      %v1448 = vpop.permute.xlu0 %1447
      %1449 = vrot.lane.b32.xlu0 %v1322, 16
      %v1450 = vpop.permute.xlu0 %1449
      %1451 = vrot.lane.b32.xlu0 %v1324, 16
      %v1452 = vpop.permute.xlu0 %1451
      %1453 = vrot.lane.b32.xlu0 %v1326, 16
      %v1454 = vpop.permute.xlu0 %1453
      %1455 = vrot.lane.b32.xlu0 %v1328, 16
      %v1456 = vpop.permute.xlu0 %1455
      %1457 = vrot.lane.b32.xlu0 %v1330, 16
      %v1458 = vpop.permute.xlu0 %1457
      %1459 = vrot.lane.b32.xlu0 %v1332, 16
      %v1460 = vpop.permute.xlu0 %1459
      %1461 = vrot.lane.b32.xlu0 %v1334, 16
      %v1462 = vpop.permute.xlu0 %1461
      %1463 = vrot.lane.b32.xlu0 %v1336, 16
      %v1464 = vpop.permute.xlu0 %1463
      %1465 = vrot.lane.b32.xlu0 %v1338, 16
      %v1466 = vpop.permute.xlu0 %1465
      %1467 = vrot.lane.b32.xlu0 %v1340, 16
      %v1468 = vpop.permute.xlu0 %1467
      %1469 = vrot.lane.b32.xlu0 %v1342, 16
      %v1470 = vpop.permute.xlu0 %1469
      %1471 = vrot.lane.b32.xlu0 %v1344, 16
      %v1472 = vpop.permute.xlu0 %1471
      %1473 = vrot.lane.b32.xlu0 %v1346, 16
      %v1474 = vpop.permute.xlu0 %1473
      %1475 = vrot.lane.b32.xlu0 %v1348, 16
      %v1476 = vpop.permute.xlu0 %1475
      %1477 = vrot.lane.b32.xlu0 %v1350, 16
      %v1478 = vpop.permute.xlu0 %1477
      %1479 = vrot.lane.b32.xlu0 %v1352, 16
      %v1480 = vpop.permute.xlu0 %1479
      %1481 = vrot.lane.b32.xlu0 %v1354, 16
      %v1482 = vpop.permute.xlu0 %1481
      %1483 = vrot.lane.b32.xlu0 %v1356, 16
      %v1484 = vpop.permute.xlu0 %1483
      %1485 = vrot.lane.b32.xlu0 %v1358, 16
      %v1486 = vpop.permute.xlu0 %1485
      %1487 = vrot.lane.b32.xlu0 %v1360, 16
      %v1488 = vpop.permute.xlu0 %1487
      %1489 = vrot.lane.b32.xlu0 %v1362, 16
      %v1490 = vpop.permute.xlu0 %1489
      %1491 = vrot.lane.b32.xlu0 %v1364, 16
      %v1492 = vpop.permute.xlu0 %1491
      %1493 = vrot.lane.b32.xlu0 %v1366, 16
      %v1494 = vpop.permute.xlu0 %1493
      %1495 = vrot.lane.b32.xlu0 %v1368, 16
      %v1496 = vpop.permute.xlu0 %1495
      %v1529 = vmul.f32 %v174, %v1434
      %v1530 = vmul.f32 %v175, %v1436
      %v1531 = vmul.f32 %v176, %v1438
      %v1532 = vmul.f32 %v177, %v1440
      %v1533 = vmul.f32 %v178, %v1442
      %v1534 = vmul.f32 %v179, %v1444
      %v1535 = vmul.f32 %v180, %v1446
      %v1536 = vmul.f32 %v181, %v1448
      %v1537 = vmul.f32 %v182, %v1450
      %v1538 = vmul.f32 %v183, %v1452
      %v1539 = vmul.f32 %v184, %v1454
      %v1540 = vmul.f32 %v185, %v1456
      %v1541 = vmul.f32 %v186, %v1458
      %v1542 = vmul.f32 %v187, %v1460
      %v1543 = vmul.f32 %v188, %v1462
      %v1544 = vmul.f32 %v189, %v1464
      %v1545 = vmul.f32 %v190, %v1466
      %v1546 = vmul.f32 %v191, %v1468
      %v1547 = vmul.f32 %v192, %v1470
      %v1548 = vmul.f32 %v193, %v1472
      %v1549 = vmul.f32 %v194, %v1474
      %v1550 = vmul.f32 %v195, %v1476
      %v1551 = vmul.f32 %v196, %v1478
      %v1552 = vmul.f32 %v197, %v1480
      %v1553 = vmul.f32 %v198, %v1482
      %v1554 = vmul.f32 %v199, %v1484
      %v1555 = vmul.f32 %v200, %v1486
      %v1556 = vmul.f32 %v201, %v1488
      %v1557 = vmul.f32 %v202, %v1490
      %v1558 = vmul.f32 %v203, %v1492
      %v1559 = vmul.f32 %v204, %v1494
      %v1560 = vmul.f32 %v205, %v1496
      %1593 = vrot.lane.b32.xlu0 %v1529, 104
      %v1594 = vpop.permute.xlu0 %1593
      %1595 = vrot.lane.b32.xlu0 %v1530, 104
      %v1596 = vpop.permute.xlu0 %1595
      %1597 = vrot.lane.b32.xlu0 %v1531, 104
      %v1598 = vpop.permute.xlu0 %1597
      %1599 = vrot.lane.b32.xlu0 %v1532, 104
      %v1600 = vpop.permute.xlu0 %1599
      %1601 = vrot.lane.b32.xlu0 %v1533, 104
      %v1602 = vpop.permute.xlu0 %1601
      %1603 = vrot.lane.b32.xlu0 %v1534, 104
      %v1604 = vpop.permute.xlu0 %1603
      %1605 = vrot.lane.b32.xlu0 %v1535, 104
      %v1606 = vpop.permute.xlu0 %1605
      %1607 = vrot.lane.b32.xlu0 %v1536, 104
      %v1608 = vpop.permute.xlu0 %1607
      %1609 = vrot.lane.b32.xlu0 %v1537, 104
      %v1610 = vpop.permute.xlu0 %1609
      %1611 = vrot.lane.b32.xlu0 %v1538, 104
      %v1612 = vpop.permute.xlu0 %1611
      %1613 = vrot.lane.b32.xlu0 %v1539, 104
      %v1614 = vpop.permute.xlu0 %1613
      %1615 = vrot.lane.b32.xlu0 %v1540, 104
      %v1616 = vpop.permute.xlu0 %1615
      %1617 = vrot.lane.b32.xlu0 %v1541, 104
      %v1618 = vpop.permute.xlu0 %1617
      %1619 = vrot.lane.b32.xlu0 %v1542, 104
      %v1620 = vpop.permute.xlu0 %1619
      %1621 = vrot.lane.b32.xlu0 %v1543, 104
      %v1622 = vpop.permute.xlu0 %1621
      %1623 = vrot.lane.b32.xlu0 %v1544, 104
      %v1624 = vpop.permute.xlu0 %1623
      %1625 = vrot.lane.b32.xlu0 %v1545, 104
      %v1626 = vpop.permute.xlu0 %1625
      %1627 = vrot.lane.b32.xlu0 %v1546, 104
      %v1628 = vpop.permute.xlu0 %1627
      %1629 = vrot.lane.b32.xlu0 %v1547, 104
      %v1630 = vpop.permute.xlu0 %1629
      %1631 = vrot.lane.b32.xlu0 %v1548, 104
      %v1632 = vpop.permute.xlu0 %1631
      %1633 = vrot.lane.b32.xlu0 %v1549, 104
      %v1634 = vpop.permute.xlu0 %1633
      %1635 = vrot.lane.b32.xlu0 %v1550, 104
      %v1636 = vpop.permute.xlu0 %1635
      %1637 = vrot.lane.b32.xlu0 %v1551, 104
      %v1638 = vpop.permute.xlu0 %1637
      %1639 = vrot.lane.b32.xlu0 %v1552, 104
      %v1640 = vpop.permute.xlu0 %1639
      %1641 = vrot.lane.b32.xlu0 %v1553, 104
      %v1642 = vpop.permute.xlu0 %1641
      %1643 = vrot.lane.b32.xlu0 %v1554, 104
      %v1644 = vpop.permute.xlu0 %1643
      %1645 = vrot.lane.b32.xlu0 %v1555, 104
      %v1646 = vpop.permute.xlu0 %1645
      %1647 = vrot.lane.b32.xlu0 %v1556, 104
      %v1648 = vpop.permute.xlu0 %1647
      %1649 = vrot.lane.b32.xlu0 %v1557, 104
      %v1650 = vpop.permute.xlu0 %1649
      %1651 = vrot.lane.b32.xlu0 %v1558, 104
      %v1652 = vpop.permute.xlu0 %1651
      %1653 = vrot.lane.b32.xlu0 %v1559, 104
      %v1654 = vpop.permute.xlu0 %1653
      %1655 = vrot.lane.b32.xlu0 %v1560, 104
      %v1656 = vpop.permute.xlu0 %1655
      %v1689 = vadd.f32 %v1178, %v1594
      %v1690 = vadd.f32 %v1181, %v1596
      %v1691 = vadd.f32 %v1184, %v1598
      %v1692 = vadd.f32 %v1187, %v1600
      %v1693 = vadd.f32 %v1190, %v1602
      %v1694 = vadd.f32 %v1193, %v1604
      %v1695 = vadd.f32 %v1196, %v1606
      %v1696 = vadd.f32 %v1199, %v1608
      %v1697 = vadd.f32 %v1202, %v1610
      %v1698 = vadd.f32 %v1205, %v1612
      %v1699 = vadd.f32 %v1208, %v1614
      %v1700 = vadd.f32 %v1211, %v1616
      %v1701 = vadd.f32 %v1214, %v1618
      %v1702 = vadd.f32 %v1217, %v1620
      %v1703 = vadd.f32 %v1220, %v1622
      %v1704 = vadd.f32 %v1223, %v1624
      %v1705 = vadd.f32 %v1226, %v1626
      %v1706 = vadd.f32 %v1229, %v1628
      %v1707 = vadd.f32 %v1232, %v1630
      %v1708 = vadd.f32 %v1235, %v1632
      %v1709 = vadd.f32 %v1238, %v1634
      %v1710 = vadd.f32 %v1241, %v1636
      %v1711 = vadd.f32 %v1244, %v1638
      %v1712 = vadd.f32 %v1247, %v1640
      %v1713 = vadd.f32 %v1250, %v1642
      %v1714 = vadd.f32 %v1253, %v1644
      %v1715 = vadd.f32 %v1256, %v1646
      %v1716 = vadd.f32 %v1259, %v1648
      %v1717 = vadd.f32 %v1262, %v1650
      %v1718 = vadd.f32 %v1265, %v1652
      %v1719 = vadd.f32 %v1268, %v1654
      %v1720 = vadd.f32 %v1271, %v1656
      %v1721 = vperm.slane %v237, 0
      %vm1722 = vcmask 64512
      %v1724 = vsel %vm1722, %v1689, 0
      %v1727 = vsel %vm1722, %v1690, 0
      %v1730 = vsel %vm1722, %v1691, 0
      %v1733 = vsel %vm1722, %v1692, 0
      %v1736 = vsel %vm1722, %v1693, 0
      %v1739 = vsel %vm1722, %v1694, 0
      %v1742 = vsel %vm1722, %v1695, 0
      %v1745 = vsel %vm1722, %v1696, 0
      %v1748 = vsel %vm1722, %v1697, 0
      %v1751 = vsel %vm1722, %v1698, 0
      %v1754 = vsel %vm1722, %v1699, 0
      %v1757 = vsel %vm1722, %v1700, 0
      %v1760 = vsel %vm1722, %v1701, 0
      %v1763 = vsel %vm1722, %v1702, 0
      %v1766 = vsel %vm1722, %v1703, 0
      %v1769 = vsel %vm1722, %v1704, 0
      %v1772 = vsel %vm1722, %v1705, 0
      %v1775 = vsel %vm1722, %v1706, 0
      %v1778 = vsel %vm1722, %v1707, 0
      %v1781 = vsel %vm1722, %v1708, 0
      %v1784 = vsel %vm1722, %v1709, 0
      %v1787 = vsel %vm1722, %v1710, 0
      %v1790 = vsel %vm1722, %v1711, 0
      %v1793 = vsel %vm1722, %v1712, 0
      %v1796 = vsel %vm1722, %v1713, 0
      %v1799 = vsel %vm1722, %v1714, 0
      %v1802 = vsel %vm1722, %v1715, 0
      %v1805 = vsel %vm1722, %v1716, 0
      %v1808 = vsel %vm1722, %v1717, 0
      %v1811 = vsel %vm1722, %v1718, 0
      %v1814 = vsel %vm1722, %v1719, 0
      %v1817 = vsel %vm1722, %v1720, 0
      %1819 = vmatpush.msra.mxu0 0.0
      %1820 = vmatpush.msra.mxu0 0.0
      %1821 = vmatpush.msra.mxu0 0.0
      %1822 = vmatpush.msra.mxu0 0.0
      %1823 = vmatpush.msra.mxu0 0.0
      %1824 = vmatpush.msra.mxu0 0.0
      %1825 = vmatpush.msra.mxu0 0.0
      %1826 = vmatpush.msra.mxu0 0.0
      %1827 = vmatpush.msra.mxu0 0.0
      %1828 = vmatpush.msra.mxu0 0.0
      %1829 = vmatpush.msra.mxu0 0.0
      %1830 = vmatpush.msra.mxu0 0.0
      %1831 = vmatpush.msra.mxu0 0.0
      %1832 = vmatpush.msra.mxu0 0.0
      %1833 = vmatpush.msra.mxu0 0.0
      %1834 = vmatpush.msra.mxu0 %v228
      %1835 = vmatmul.f32.gmra.mxu0 %v1724
      %v1836 = vpop.f32.mrf.mxu0
      %v1837 = vadd.f32 %v1721, %v1836
      %1838 = vmatmul.f32.gmra.mxu0 %v1727
      %v1839 = vpop.f32.mrf.mxu0
      %v1840 = vadd.f32 %v1721, %v1839
      %1841 = vmatmul.f32.gmra.mxu0 %v1730
      %v1842 = vpop.f32.mrf.mxu0
      %v1843 = vadd.f32 %v1721, %v1842
      %1844 = vmatmul.f32.gmra.mxu0 %v1733
      %v1845 = vpop.f32.mrf.mxu0
      %v1846 = vadd.f32 %v1721, %v1845
      %1847 = vmatmul.f32.gmra.mxu0 %v1736
      %v1848 = vpop.f32.mrf.mxu0
      %v1849 = vadd.f32 %v1721, %v1848
      %1850 = vmatmul.f32.gmra.mxu0 %v1739
      %v1851 = vpop.f32.mrf.mxu0
      %v1852 = vadd.f32 %v1721, %v1851
      %1853 = vmatmul.f32.gmra.mxu0 %v1742
      %v1854 = vpop.f32.mrf.mxu0
      %v1855 = vadd.f32 %v1721, %v1854
      %1856 = vmatmul.f32.gmra.mxu0 %v1745
      %v1857 = vpop.f32.mrf.mxu0
      %v1858 = vadd.f32 %v1721, %v1857
      %1859 = vmatmul.f32.gmra.mxu0 %v1748
      %v1860 = vpop.f32.mrf.mxu0
      %v1861 = vadd.f32 %v1721, %v1860
      %1862 = vmatmul.f32.gmra.mxu0 %v1751
      %v1863 = vpop.f32.mrf.mxu0
      %v1864 = vadd.f32 %v1721, %v1863
      %1865 = vmatmul.f32.gmra.mxu0 %v1754
      %v1866 = vpop.f32.mrf.mxu0
      %v1867 = vadd.f32 %v1721, %v1866
      %1868 = vmatmul.f32.gmra.mxu0 %v1757
      %v1869 = vpop.f32.mrf.mxu0
      %v1870 = vadd.f32 %v1721, %v1869
      %1871 = vmatmul.f32.gmra.mxu0 %v1760
      %v1872 = vpop.f32.mrf.mxu0
      %v1873 = vadd.f32 %v1721, %v1872
      %1874 = vmatmul.f32.gmra.mxu0 %v1763
      %v1875 = vpop.f32.mrf.mxu0
      %v1876 = vadd.f32 %v1721, %v1875
      %1877 = vmatmul.f32.gmra.mxu0 %v1766
      %v1878 = vpop.f32.mrf.mxu0
      %v1879 = vadd.f32 %v1721, %v1878
      %1880 = vmatmul.f32.gmra.mxu0 %v1769
      %v1881 = vpop.f32.mrf.mxu0
      %v1882 = vadd.f32 %v1721, %v1881
      %1883 = vmatmul.f32.gmra.mxu0 %v1772
      %v1884 = vpop.f32.mrf.mxu0
      %v1885 = vadd.f32 %v1721, %v1884
      %1886 = vmatmul.f32.gmra.mxu0 %v1775
      %v1887 = vpop.f32.mrf.mxu0
      %v1888 = vadd.f32 %v1721, %v1887
      %1889 = vmatmul.f32.gmra.mxu0 %v1778
      %v1890 = vpop.f32.mrf.mxu0
      %v1891 = vadd.f32 %v1721, %v1890
      %1892 = vmatmul.f32.gmra.mxu0 %v1781
      %v1893 = vpop.f32.mrf.mxu0
      %v1894 = vadd.f32 %v1721, %v1893
      %1895 = vmatmul.f32.gmra.mxu0 %v1784
      %v1896 = vpop.f32.mrf.mxu0
      %v1897 = vadd.f32 %v1721, %v1896
      %1898 = vmatmul.f32.gmra.mxu0 %v1787
      %v1899 = vpop.f32.mrf.mxu0
      %v1900 = vadd.f32 %v1721, %v1899
      %1901 = vmatmul.f32.gmra.mxu0 %v1790
      %v1902 = vpop.f32.mrf.mxu0
      %v1903 = vadd.f32 %v1721, %v1902
      %1904 = vmatmul.f32.gmra.mxu0 %v1793
      %v1905 = vpop.f32.mrf.mxu0
      %v1906 = vadd.f32 %v1721, %v1905
      %1907 = vmatmul.f32.gmra.mxu0 %v1796
      %v1908 = vpop.f32.mrf.mxu0
      %v1909 = vadd.f32 %v1721, %v1908
      %1910 = vmatmul.f32.gmra.mxu0 %v1799
      %v1911 = vpop.f32.mrf.mxu0
      %v1912 = vadd.f32 %v1721, %v1911
      %1913 = vmatmul.f32.gmra.mxu0 %v1802
      %v1914 = vpop.f32.mrf.mxu0
      %v1915 = vadd.f32 %v1721, %v1914
      %1916 = vmatmul.f32.gmra.mxu0 %v1805
      %v1917 = vpop.f32.mrf.mxu0
      %v1918 = vadd.f32 %v1721, %v1917
      %1919 = vmatmul.f32.gmra.mxu0 %v1808
      %v1920 = vpop.f32.mrf.mxu0
      %v1921 = vadd.f32 %v1721, %v1920
      %1922 = vmatmul.f32.gmra.mxu0 %v1811
      %v1923 = vpop.f32.mrf.mxu0
      %v1924 = vadd.f32 %v1721, %v1923
      %1925 = vmatmul.f32.gmra.mxu0 %v1814
      %v1926 = vpop.f32.mrf.mxu0
      %v1927 = vadd.f32 %v1721, %v1926
      %1928 = vmatmul.f32.gmra.mxu0 %v1817
      %v1929 = vpop.f32.mrf.mxu0
      %v1930 = vadd.f32 %v1721, %v1929
      %1931 = vdwg.mxu0
      %v1932 = vtanh.pop %v1837
      %v1933 = vtanh.pop %v1840
      %v1934 = vtanh.pop %v1843
      %v1935 = vtanh.pop %v1846
      %v1936 = vtanh.pop %v1849
      %v1937 = vtanh.pop %v1852
      %v1938 = vtanh.pop %v1855
      %v1939 = vtanh.pop %v1858
      %v1940 = vtanh.pop %v1861
      %v1941 = vtanh.pop %v1864
      %v1942 = vtanh.pop %v1867
      %v1943 = vtanh.pop %v1870
      %v1944 = vtanh.pop %v1873
      %v1945 = vtanh.pop %v1876
      %v1946 = vtanh.pop %v1879
      %v1947 = vtanh.pop %v1882
      %v1948 = vtanh.pop %v1885
      %v1949 = vtanh.pop %v1888
      %v1950 = vtanh.pop %v1891
      %v1951 = vtanh.pop %v1894
      %v1952 = vtanh.pop %v1897
      %v1953 = vtanh.pop %v1900
      %v1954 = vtanh.pop %v1903
      %v1955 = vtanh.pop %v1906
      %v1956 = vtanh.pop %v1909
      %v1957 = vtanh.pop %v1912
      %v1958 = vtanh.pop %v1915
      %v1959 = vtanh.pop %v1918
      %v1960 = vtanh.pop %v1921
      %v1961 = vtanh.pop %v1924
      %v1962 = vtanh.pop %v1927
      %v1963 = vtanh.pop %v1930
      %v1964 = vmul.f32 %v1837, 0.1
      %v1965 = vmul.f32 %v1840, 0.1
      %v1966 = vmul.f32 %v1843, 0.1
      %v1967 = vmul.f32 %v1846, 0.1
      %v1968 = vmul.f32 %v1849, 0.1
      %v1969 = vmul.f32 %v1852, 0.1
      %v1970 = vmul.f32 %v1855, 0.1
      %v1971 = vmul.f32 %v1858, 0.1
      %v1972 = vmul.f32 %v1861, 0.1
      %v1973 = vmul.f32 %v1864, 0.1
      %v1974 = vmul.f32 %v1867, 0.1
      %v1975 = vmul.f32 %v1870, 0.1
      %v1976 = vmul.f32 %v1873, 0.1
      %v1977 = vmul.f32 %v1876, 0.1
      %v1978 = vmul.f32 %v1879, 0.1
      %v1979 = vmul.f32 %v1882, 0.1
      %v1980 = vmul.f32 %v1885, 0.1
      %v1981 = vmul.f32 %v1888, 0.1
      %v1982 = vmul.f32 %v1891, 0.1
      %v1983 = vmul.f32 %v1894, 0.1
      %v1984 = vmul.f32 %v1897, 0.1
      %v1985 = vmul.f32 %v1900, 0.1
      %v1986 = vmul.f32 %v1903, 0.1
      %v1987 = vmul.f32 %v1906, 0.1
      %v1988 = vmul.f32 %v1909, 0.1
      %v1989 = vmul.f32 %v1912, 0.1
      %v1990 = vmul.f32 %v1915, 0.1
      %v1991 = vmul.f32 %v1918, 0.1
      %v1992 = vmul.f32 %v1921, 0.1
      %v1993 = vmul.f32 %v1924, 0.1
      %v1994 = vmul.f32 %v1927, 0.1
      %v1995 = vmul.f32 %v1930, 0.1
      %v1996 = vadd.f32 %v1932, %v1964
      %v1997 = vadd.f32 %v1933, %v1965
      %v1998 = vadd.f32 %v1934, %v1966
      %v1999 = vadd.f32 %v1935, %v1967
      %v2000 = vadd.f32 %v1936, %v1968
      %v2001 = vadd.f32 %v1937, %v1969
      %v2002 = vadd.f32 %v1938, %v1970
      %v2003 = vadd.f32 %v1939, %v1971
      %v2004 = vadd.f32 %v1940, %v1972
      %v2005 = vadd.f32 %v1941, %v1973
      %v2006 = vadd.f32 %v1942, %v1974
      %v2007 = vadd.f32 %v1943, %v1975
      %v2008 = vadd.f32 %v1944, %v1976
      %v2009 = vadd.f32 %v1945, %v1977
      %v2010 = vadd.f32 %v1946, %v1978
      %v2011 = vadd.f32 %v1947, %v1979
      %v2012 = vadd.f32 %v1948, %v1980
      %v2013 = vadd.f32 %v1949, %v1981
      %v2014 = vadd.f32 %v1950, %v1982
      %v2015 = vadd.f32 %v1951, %v1983
      %v2016 = vadd.f32 %v1952, %v1984
      %v2017 = vadd.f32 %v1953, %v1985
      %v2018 = vadd.f32 %v1954, %v1986
      %v2019 = vadd.f32 %v1955, %v1987
      %v2020 = vadd.f32 %v1956, %v1988
      %v2021 = vadd.f32 %v1957, %v1989
      %v2022 = vadd.f32 %v1958, %v1990
      %v2023 = vadd.f32 %v1959, %v1991
      %v2024 = vadd.f32 %v1960, %v1992
      %v2025 = vadd.f32 %v1961, %v1993
      %v2026 = vadd.f32 %v1962, %v1994
      %v2027 = vadd.f32 %v1963, %v1995
      %v2028 = vperm.slane %v238, 0
      %vm2029 = vcmask 261120
      %v2031 = vsel %vm2029, %v1996, 0
      %v2034 = vsel %vm2029, %v1997, 0
      %v2037 = vsel %vm2029, %v1998, 0
      %v2040 = vsel %vm2029, %v1999, 0
      %v2043 = vsel %vm2029, %v2000, 0
      %v2046 = vsel %vm2029, %v2001, 0
      %v2049 = vsel %vm2029, %v2002, 0
      %v2052 = vsel %vm2029, %v2003, 0
      %v2055 = vsel %vm2029, %v2004, 0
      %v2058 = vsel %vm2029, %v2005, 0
      %v2061 = vsel %vm2029, %v2006, 0
      %v2064 = vsel %vm2029, %v2007, 0
      %v2067 = vsel %vm2029, %v2008, 0
      %v2070 = vsel %vm2029, %v2009, 0
      %v2073 = vsel %vm2029, %v2010, 0
      %v2076 = vsel %vm2029, %v2011, 0
      %v2079 = vsel %vm2029, %v2012, 0
      %v2082 = vsel %vm2029, %v2013, 0
      %v2085 = vsel %vm2029, %v2014, 0
      %v2088 = vsel %vm2029, %v2015, 0
      %v2091 = vsel %vm2029, %v2016, 0
      %v2094 = vsel %vm2029, %v2017, 0
      %v2097 = vsel %vm2029, %v2018, 0
      %v2100 = vsel %vm2029, %v2019, 0
      %v2103 = vsel %vm2029, %v2020, 0
      %v2106 = vsel %vm2029, %v2021, 0
      %v2109 = vsel %vm2029, %v2022, 0
      %v2112 = vsel %vm2029, %v2023, 0
      %v2115 = vsel %vm2029, %v2024, 0
      %v2118 = vsel %vm2029, %v2025, 0
      %v2121 = vsel %vm2029, %v2026, 0
      %v2124 = vsel %vm2029, %v2027, 0
      %2126 = vmatpush.msra.mxu0 0.0
      %2127 = vmatpush.msra.mxu0 0.0
      %2128 = vmatpush.msra.mxu0 0.0
      %2129 = vmatpush.msra.mxu0 0.0
      %2130 = vmatpush.msra.mxu0 0.0
      %2131 = vmatpush.msra.mxu0 0.0
      %2132 = vmatpush.msra.mxu0 0.0
      %2133 = vmatpush.msra.mxu0 0.0
      %2134 = vmatpush.msra.mxu0 0.0
      %2135 = vmatpush.msra.mxu0 0.0
      %2136 = vmatpush.msra.mxu0 0.0
      %2137 = vmatpush.msra.mxu0 0.0
      %2138 = vmatpush.msra.mxu0 %v232
      %2139 = vmatpush.msra.mxu0 %v231
      %2140 = vmatpush.msra.mxu0 %v230
      %2141 = vmatpush.msra.mxu0 %v229
      %2142 = vmatmul.f32.gmra.mxu0 %v2031
      %v2143 = vpop.f32.mrf.mxu0
      %v2144 = vadd.f32 %v2028, %v2143
      %2145 = vmatmul.f32.gmra.mxu0 %v2034
      %v2146 = vpop.f32.mrf.mxu0
      %v2147 = vadd.f32 %v2028, %v2146
      %2148 = vmatmul.f32.gmra.mxu0 %v2037
      %v2149 = vpop.f32.mrf.mxu0
      %v2150 = vadd.f32 %v2028, %v2149
      %2151 = vmatmul.f32.gmra.mxu0 %v2040
      %v2152 = vpop.f32.mrf.mxu0
      %v2153 = vadd.f32 %v2028, %v2152
      %2154 = vmatmul.f32.gmra.mxu0 %v2043
      %v2155 = vpop.f32.mrf.mxu0
      %v2156 = vadd.f32 %v2028, %v2155
      %2157 = vmatmul.f32.gmra.mxu0 %v2046
      %v2158 = vpop.f32.mrf.mxu0
      %v2159 = vadd.f32 %v2028, %v2158
      %2160 = vmatmul.f32.gmra.mxu0 %v2049
      %v2161 = vpop.f32.mrf.mxu0
      %v2162 = vadd.f32 %v2028, %v2161
      %2163 = vmatmul.f32.gmra.mxu0 %v2052
      %v2164 = vpop.f32.mrf.mxu0
      %v2165 = vadd.f32 %v2028, %v2164
      %2166 = vmatmul.f32.gmra.mxu0 %v2055
      %v2167 = vpop.f32.mrf.mxu0
      %v2168 = vadd.f32 %v2028, %v2167
      %2169 = vmatmul.f32.gmra.mxu0 %v2058
      %v2170 = vpop.f32.mrf.mxu0
      %v2171 = vadd.f32 %v2028, %v2170
      %2172 = vmatmul.f32.gmra.mxu0 %v2061
      %v2173 = vpop.f32.mrf.mxu0
      %v2174 = vadd.f32 %v2028, %v2173
      %2175 = vmatmul.f32.gmra.mxu0 %v2064
      %v2176 = vpop.f32.mrf.mxu0
      %v2177 = vadd.f32 %v2028, %v2176
      %2178 = vmatmul.f32.gmra.mxu0 %v2067
      %v2179 = vpop.f32.mrf.mxu0
      %v2180 = vadd.f32 %v2028, %v2179
      %2181 = vmatmul.f32.gmra.mxu0 %v2070
      %v2182 = vpop.f32.mrf.mxu0
      %v2183 = vadd.f32 %v2028, %v2182
      %2184 = vmatmul.f32.gmra.mxu0 %v2073
      %v2185 = vpop.f32.mrf.mxu0
      %v2186 = vadd.f32 %v2028, %v2185
      %2187 = vmatmul.f32.gmra.mxu0 %v2076
      %v2188 = vpop.f32.mrf.mxu0
      %v2189 = vadd.f32 %v2028, %v2188
      %2190 = vmatmul.f32.gmra.mxu0 %v2079
      %v2191 = vpop.f32.mrf.mxu0
      %v2192 = vadd.f32 %v2028, %v2191
      %2193 = vmatmul.f32.gmra.mxu0 %v2082
      %v2194 = vpop.f32.mrf.mxu0
      %v2195 = vadd.f32 %v2028, %v2194
      %2196 = vmatmul.f32.gmra.mxu0 %v2085
      %v2197 = vpop.f32.mrf.mxu0
      %v2198 = vadd.f32 %v2028, %v2197
      %2199 = vmatmul.f32.gmra.mxu0 %v2088
      %v2200 = vpop.f32.mrf.mxu0
      %v2201 = vadd.f32 %v2028, %v2200
      %2202 = vmatmul.f32.gmra.mxu0 %v2091
      %v2203 = vpop.f32.mrf.mxu0
      %v2204 = vadd.f32 %v2028, %v2203
      %2205 = vmatmul.f32.gmra.mxu0 %v2094
      %v2206 = vpop.f32.mrf.mxu0
      %v2207 = vadd.f32 %v2028, %v2206
      %2208 = vmatmul.f32.gmra.mxu0 %v2097
      %v2209 = vpop.f32.mrf.mxu0
      %v2210 = vadd.f32 %v2028, %v2209
      %2211 = vmatmul.f32.gmra.mxu0 %v2100
      %v2212 = vpop.f32.mrf.mxu0
      %v2213 = vadd.f32 %v2028, %v2212
      %2214 = vmatmul.f32.gmra.mxu0 %v2103
      %v2215 = vpop.f32.mrf.mxu0
      %v2216 = vadd.f32 %v2028, %v2215
      %2217 = vmatmul.f32.gmra.mxu0 %v2106
      %v2218 = vpop.f32.mrf.mxu0
      %v2219 = vadd.f32 %v2028, %v2218
      %2220 = vmatmul.f32.gmra.mxu0 %v2109
      %v2221 = vpop.f32.mrf.mxu0
      %v2222 = vadd.f32 %v2028, %v2221
      %2223 = vmatmul.f32.gmra.mxu0 %v2112
      %v2224 = vpop.f32.mrf.mxu0
      %v2225 = vadd.f32 %v2028, %v2224
      %2226 = vmatmul.f32.gmra.mxu0 %v2115
      %v2227 = vpop.f32.mrf.mxu0
      %v2228 = vadd.f32 %v2028, %v2227
      %2229 = vmatmul.f32.gmra.mxu0 %v2118
      %v2230 = vpop.f32.mrf.mxu0
      %v2231 = vadd.f32 %v2028, %v2230
      %2232 = vmatmul.f32.gmra.mxu0 %v2121
      %v2233 = vpop.f32.mrf.mxu0
      %v2234 = vadd.f32 %v2028, %v2233
      %2235 = vmatmul.f32.gmra.mxu0 %v2124
      %v2236 = vpop.f32.mrf.mxu0
      %v2237 = vadd.f32 %v2028, %v2236
      %2238 = vdwg.mxu0
      %vm2239 = vcmask 130048
      %2240 = vst.msk [vmem:[%s172] sm:$0xff] %vm2239, %v2144
      %2241 = vst.msk [vmem:[%s172 + $0x8] sm:$0xff] %vm2239, %v2147
      %2242 = vst.msk [vmem:[%s172 + $0x10] sm:$0xff] %vm2239, %v2150
      %2243 = vst.msk [vmem:[%s172 + $0x18] sm:$0xff] %vm2239, %v2153
      %2244 = vst.msk [vmem:[%s172 + $0x20] sm:$0xff] %vm2239, %v2156
      %2245 = vst.msk [vmem:[%s172 + $0x28] sm:$0xff] %vm2239, %v2159
      %2246 = vst.msk [vmem:[%s172 + $0x30] sm:$0xff] %vm2239, %v2162
      %2247 = vst.msk [vmem:[%s172 + $0x38] sm:$0xff] %vm2239, %v2165
      %2248 = vst.msk [vmem:[%s172 + $0x40] sm:$0xff] %vm2239, %v2168
      %2249 = vst.msk [vmem:[%s172 + $0x48] sm:$0xff] %vm2239, %v2171
      %2250 = vst.msk [vmem:[%s172 + $0x50] sm:$0xff] %vm2239, %v2174
      %2251 = vst.msk [vmem:[%s172 + $0x58] sm:$0xff] %vm2239, %v2177
      %2252 = vst.msk [vmem:[%s172 + $0x60] sm:$0xff] %vm2239, %v2180
      %2253 = vst.msk [vmem:[%s172 + $0x68] sm:$0xff] %vm2239, %v2183
      %2254 = vst.msk [vmem:[%s172 + $0x70] sm:$0xff] %vm2239, %v2186
      %2255 = vst.msk [vmem:[%s172 + $0x78] sm:$0xff] %vm2239, %v2189
      %2256 = vst.msk [vmem:[%s172 + $0x80] sm:$0xff] %vm2239, %v2192
      %2257 = vst.msk [vmem:[%s172 + $0x88] sm:$0xff] %vm2239, %v2195
      %2258 = vst.msk [vmem:[%s172 + $0x90] sm:$0xff] %vm2239, %v2198
      %2259 = vst.msk [vmem:[%s172 + $0x98] sm:$0xff] %vm2239, %v2201
      %2260 = vst.msk [vmem:[%s172 + $0xa0] sm:$0xff] %vm2239, %v2204
      %2261 = vst.msk [vmem:[%s172 + $0xa8] sm:$0xff] %vm2239, %v2207
      %2262 = vst.msk [vmem:[%s172 + $0xb0] sm:$0xff] %vm2239, %v2210
      %2263 = vst.msk [vmem:[%s172 + $0xb8] sm:$0xff] %vm2239, %v2213
      %2264 = vst.msk [vmem:[%s172 + $0xc0] sm:$0xff] %vm2239, %v2216
      %2265 = vst.msk [vmem:[%s172 + $0xc8] sm:$0xff] %vm2239, %v2219
      %2266 = vst.msk [vmem:[%s172 + $0xd0] sm:$0xff] %vm2239, %v2222
      %2267 = vst.msk [vmem:[%s172 + $0xd8] sm:$0xff] %vm2239, %v2225
      %2268 = vst.msk [vmem:[%s172 + $0xe0] sm:$0xff] %vm2239, %v2228
      %2269 = vst.msk [vmem:[%s172 + $0xe8] sm:$0xff] %vm2239, %v2231
      %2270 = vst.msk [vmem:[%s172 + $0xf0] sm:$0xff] %vm2239, %v2234
      %2271 = vst.msk [vmem:[%s172 + $0xf8] sm:$0xff] %vm2239, %v2237
      %2304 = vrot.lane.b32.xlu0 %v1178, 16
      %v2305 = vpop.permute.xlu0 %2304
      %2306 = vrot.lane.b32.xlu0 %v1181, 16
      %v2307 = vpop.permute.xlu0 %2306
      %2308 = vrot.lane.b32.xlu0 %v1184, 16
      %v2309 = vpop.permute.xlu0 %2308
      %2310 = vrot.lane.b32.xlu0 %v1187, 16
      %v2311 = vpop.permute.xlu0 %2310
      %2312 = vrot.lane.b32.xlu0 %v1190, 16
      %v2313 = vpop.permute.xlu0 %2312
      %2314 = vrot.lane.b32.xlu0 %v1193, 16
      %v2315 = vpop.permute.xlu0 %2314
      %2316 = vrot.lane.b32.xlu0 %v1196, 16
      %v2317 = vpop.permute.xlu0 %2316
      %2318 = vrot.lane.b32.xlu0 %v1199, 16
      %v2319 = vpop.permute.xlu0 %2318
      %2320 = vrot.lane.b32.xlu0 %v1202, 16
      %v2321 = vpop.permute.xlu0 %2320
      %2322 = vrot.lane.b32.xlu0 %v1205, 16
      %v2323 = vpop.permute.xlu0 %2322
      %2324 = vrot.lane.b32.xlu0 %v1208, 16
      %v2325 = vpop.permute.xlu0 %2324
      %2326 = vrot.lane.b32.xlu0 %v1211, 16
      %v2327 = vpop.permute.xlu0 %2326
      %2328 = vrot.lane.b32.xlu0 %v1214, 16
      %v2329 = vpop.permute.xlu0 %2328
      %2330 = vrot.lane.b32.xlu0 %v1217, 16
      %v2331 = vpop.permute.xlu0 %2330
      %2332 = vrot.lane.b32.xlu0 %v1220, 16
      %v2333 = vpop.permute.xlu0 %2332
      %2334 = vrot.lane.b32.xlu0 %v1223, 16
      %v2335 = vpop.permute.xlu0 %2334
      %2336 = vrot.lane.b32.xlu0 %v1226, 16
      %v2337 = vpop.permute.xlu0 %2336
      %2338 = vrot.lane.b32.xlu0 %v1229, 16
      %v2339 = vpop.permute.xlu0 %2338
      %2340 = vrot.lane.b32.xlu0 %v1232, 16
      %v2341 = vpop.permute.xlu0 %2340
      %2342 = vrot.lane.b32.xlu0 %v1235, 16
      %v2343 = vpop.permute.xlu0 %2342
      %2344 = vrot.lane.b32.xlu0 %v1238, 16
      %v2345 = vpop.permute.xlu0 %2344
      %2346 = vrot.lane.b32.xlu0 %v1241, 16
      %v2347 = vpop.permute.xlu0 %2346
      %2348 = vrot.lane.b32.xlu0 %v1244, 16
      %v2349 = vpop.permute.xlu0 %2348
      %2350 = vrot.lane.b32.xlu0 %v1247, 16
      %v2351 = vpop.permute.xlu0 %2350
      %2352 = vrot.lane.b32.xlu0 %v1250, 16
      %v2353 = vpop.permute.xlu0 %2352
      %2354 = vrot.lane.b32.xlu0 %v1253, 16
      %v2355 = vpop.permute.xlu0 %2354
      %2356 = vrot.lane.b32.xlu0 %v1256, 16
      %v2357 = vpop.permute.xlu0 %2356
      %2358 = vrot.lane.b32.xlu0 %v1259, 16
      %v2359 = vpop.permute.xlu0 %2358
      %2360 = vrot.lane.b32.xlu0 %v1262, 16
      %v2361 = vpop.permute.xlu0 %2360
      %2362 = vrot.lane.b32.xlu0 %v1265, 16
      %v2363 = vpop.permute.xlu0 %2362
      %2364 = vrot.lane.b32.xlu0 %v1268, 16
      %v2365 = vpop.permute.xlu0 %2364
      %2366 = vrot.lane.b32.xlu0 %v1271, 16
      %v2367 = vpop.permute.xlu0 %2366
      %vm2400 = vcmask 195712
      %2401 = vst.msk [vmem:[%s172] sm:$0xff] %vm2400, %v2305
      %2402 = vst.msk [vmem:[%s172 + $0x8] sm:$0xff] %vm2400, %v2307
      %2403 = vst.msk [vmem:[%s172 + $0x10] sm:$0xff] %vm2400, %v2309
      %2404 = vst.msk [vmem:[%s172 + $0x18] sm:$0xff] %vm2400, %v2311
      %2405 = vst.msk [vmem:[%s172 + $0x20] sm:$0xff] %vm2400, %v2313
      %2406 = vst.msk [vmem:[%s172 + $0x28] sm:$0xff] %vm2400, %v2315
      %2407 = vst.msk [vmem:[%s172 + $0x30] sm:$0xff] %vm2400, %v2317
      %2408 = vst.msk [vmem:[%s172 + $0x38] sm:$0xff] %vm2400, %v2319
      %2409 = vst.msk [vmem:[%s172 + $0x40] sm:$0xff] %vm2400, %v2321
      %2410 = vst.msk [vmem:[%s172 + $0x48] sm:$0xff] %vm2400, %v2323
      %2411 = vst.msk [vmem:[%s172 + $0x50] sm:$0xff] %vm2400, %v2325
      %2412 = vst.msk [vmem:[%s172 + $0x58] sm:$0xff] %vm2400, %v2327
      %2413 = vst.msk [vmem:[%s172 + $0x60] sm:$0xff] %vm2400, %v2329
      %2414 = vst.msk [vmem:[%s172 + $0x68] sm:$0xff] %vm2400, %v2331
      %2415 = vst.msk [vmem:[%s172 + $0x70] sm:$0xff] %vm2400, %v2333
      %2416 = vst.msk [vmem:[%s172 + $0x78] sm:$0xff] %vm2400, %v2335
      %2417 = vst.msk [vmem:[%s172 + $0x80] sm:$0xff] %vm2400, %v2337
      %2418 = vst.msk [vmem:[%s172 + $0x88] sm:$0xff] %vm2400, %v2339
      %2419 = vst.msk [vmem:[%s172 + $0x90] sm:$0xff] %vm2400, %v2341
      %2420 = vst.msk [vmem:[%s172 + $0x98] sm:$0xff] %vm2400, %v2343
      %2421 = vst.msk [vmem:[%s172 + $0xa0] sm:$0xff] %vm2400, %v2345
      %2422 = vst.msk [vmem:[%s172 + $0xa8] sm:$0xff] %vm2400, %v2347
      %2423 = vst.msk [vmem:[%s172 + $0xb0] sm:$0xff] %vm2400, %v2349
      %2424 = vst.msk [vmem:[%s172 + $0xb8] sm:$0xff] %vm2400, %v2351
      %2425 = vst.msk [vmem:[%s172 + $0xc0] sm:$0xff] %vm2400, %v2353
      %2426 = vst.msk [vmem:[%s172 + $0xc8] sm:$0xff] %vm2400, %v2355
      %2427 = vst.msk [vmem:[%s172 + $0xd0] sm:$0xff] %vm2400, %v2357
      %2428 = vst.msk [vmem:[%s172 + $0xd8] sm:$0xff] %vm2400, %v2359
      %2429 = vst.msk [vmem:[%s172 + $0xe0] sm:$0xff] %vm2400, %v2361
      %2430 = vst.msk [vmem:[%s172 + $0xe8] sm:$0xff] %vm2400, %v2363
      %2431 = vst.msk [vmem:[%s172 + $0xf0] sm:$0xff] %vm2400, %v2365
      %2432 = vst.msk [vmem:[%s172 + $0xf8] sm:$0xff] %vm2400, %v2367
      %2465 = vrot.lane.b32.xlu0 %v1369, 16
      %v2466 = vpop.permute.xlu0 %2465
      %2467 = vrot.lane.b32.xlu0 %v1370, 16
      %v2468 = vpop.permute.xlu0 %2467
      %2469 = vrot.lane.b32.xlu0 %v1371, 16
      %v2470 = vpop.permute.xlu0 %2469
      %2471 = vrot.lane.b32.xlu0 %v1372, 16
      %v2472 = vpop.permute.xlu0 %2471
      %2473 = vrot.lane.b32.xlu0 %v1373, 16
      %v2474 = vpop.permute.xlu0 %2473
      %2475 = vrot.lane.b32.xlu0 %v1374, 16
      %v2476 = vpop.permute.xlu0 %2475
      %2477 = vrot.lane.b32.xlu0 %v1375, 16
      %v2478 = vpop.permute.xlu0 %2477
      %2479 = vrot.lane.b32.xlu0 %v1376, 16
      %v2480 = vpop.permute.xlu0 %2479
      %2481 = vrot.lane.b32.xlu0 %v1377, 16
      %v2482 = vpop.permute.xlu0 %2481
      %2483 = vrot.lane.b32.xlu0 %v1378, 16
      %v2484 = vpop.permute.xlu0 %2483
      %2485 = vrot.lane.b32.xlu0 %v1379, 16
      %v2486 = vpop.permute.xlu0 %2485
      %2487 = vrot.lane.b32.xlu0 %v1380, 16
      %v2488 = vpop.permute.xlu0 %2487
      %2489 = vrot.lane.b32.xlu0 %v1381, 16
      %v2490 = vpop.permute.xlu0 %2489
      %2491 = vrot.lane.b32.xlu0 %v1382, 16
      %v2492 = vpop.permute.xlu0 %2491
      %2493 = vrot.lane.b32.xlu0 %v1383, 16
      %v2494 = vpop.permute.xlu0 %2493
      %2495 = vrot.lane.b32.xlu0 %v1384, 16
      %v2496 = vpop.permute.xlu0 %2495
      %2497 = vrot.lane.b32.xlu0 %v1385, 16
      %v2498 = vpop.permute.xlu0 %2497
      %2499 = vrot.lane.b32.xlu0 %v1386, 16
      %v2500 = vpop.permute.xlu0 %2499
      %2501 = vrot.lane.b32.xlu0 %v1387, 16
      %v2502 = vpop.permute.xlu0 %2501
      %2503 = vrot.lane.b32.xlu0 %v1388, 16
      %v2504 = vpop.permute.xlu0 %2503
      %2505 = vrot.lane.b32.xlu0 %v1389, 16
      %v2506 = vpop.permute.xlu0 %2505
      %2507 = vrot.lane.b32.xlu0 %v1390, 16
      %v2508 = vpop.permute.xlu0 %2507
      %2509 = vrot.lane.b32.xlu0 %v1391, 16
      %v2510 = vpop.permute.xlu0 %2509
      %2511 = vrot.lane.b32.xlu0 %v1392, 16
      %v2512 = vpop.permute.xlu0 %2511
      %2513 = vrot.lane.b32.xlu0 %v1393, 16
      %v2514 = vpop.permute.xlu0 %2513
      %2515 = vrot.lane.b32.xlu0 %v1394, 16
      %v2516 = vpop.permute.xlu0 %2515
      %2517 = vrot.lane.b32.xlu0 %v1395, 16
      %v2518 = vpop.permute.xlu0 %2517
      %2519 = vrot.lane.b32.xlu0 %v1396, 16
      %v2520 = vpop.permute.xlu0 %2519
      %2521 = vrot.lane.b32.xlu0 %v1397, 16
      %v2522 = vpop.permute.xlu0 %2521
      %2523 = vrot.lane.b32.xlu0 %v1398, 16
      %v2524 = vpop.permute.xlu0 %2523
      %2525 = vrot.lane.b32.xlu0 %v1399, 16
      %v2526 = vpop.permute.xlu0 %2525
      %2527 = vrot.lane.b32.xlu0 %v1400, 16
      %v2528 = vpop.permute.xlu0 %2527
      %vm2561 = vcmask 261312
      %2562 = vst.msk [vmem:[%s172] sm:$0xff] %vm2561, %v2466
      %2563 = vst.msk [vmem:[%s172 + $0x8] sm:$0xff] %vm2561, %v2468
      %2564 = vst.msk [vmem:[%s172 + $0x10] sm:$0xff] %vm2561, %v2470
      %2565 = vst.msk [vmem:[%s172 + $0x18] sm:$0xff] %vm2561, %v2472
      %2566 = vst.msk [vmem:[%s172 + $0x20] sm:$0xff] %vm2561, %v2474
      %2567 = vst.msk [vmem:[%s172 + $0x28] sm:$0xff] %vm2561, %v2476
      %2568 = vst.msk [vmem:[%s172 + $0x30] sm:$0xff] %vm2561, %v2478
      %2569 = vst.msk [vmem:[%s172 + $0x38] sm:$0xff] %vm2561, %v2480
      %2570 = vst.msk [vmem:[%s172 + $0x40] sm:$0xff] %vm2561, %v2482
      %2571 = vst.msk [vmem:[%s172 + $0x48] sm:$0xff] %vm2561, %v2484
      %2572 = vst.msk [vmem:[%s172 + $0x50] sm:$0xff] %vm2561, %v2486
      %2573 = vst.msk [vmem:[%s172 + $0x58] sm:$0xff] %vm2561, %v2488
      %2574 = vst.msk [vmem:[%s172 + $0x60] sm:$0xff] %vm2561, %v2490
      %2575 = vst.msk [vmem:[%s172 + $0x68] sm:$0xff] %vm2561, %v2492
      %2576 = vst.msk [vmem:[%s172 + $0x70] sm:$0xff] %vm2561, %v2494
      %2577 = vst.msk [vmem:[%s172 + $0x78] sm:$0xff] %vm2561, %v2496
      %2578 = vst.msk [vmem:[%s172 + $0x80] sm:$0xff] %vm2561, %v2498
      %2579 = vst.msk [vmem:[%s172 + $0x88] sm:$0xff] %vm2561, %v2500
      %2580 = vst.msk [vmem:[%s172 + $0x90] sm:$0xff] %vm2561, %v2502
      %2581 = vst.msk [vmem:[%s172 + $0x98] sm:$0xff] %vm2561, %v2504
      %2582 = vst.msk [vmem:[%s172 + $0xa0] sm:$0xff] %vm2561, %v2506
      %2583 = vst.msk [vmem:[%s172 + $0xa8] sm:$0xff] %vm2561, %v2508
      %2584 = vst.msk [vmem:[%s172 + $0xb0] sm:$0xff] %vm2561, %v2510
      %2585 = vst.msk [vmem:[%s172 + $0xb8] sm:$0xff] %vm2561, %v2512
      %2586 = vst.msk [vmem:[%s172 + $0xc0] sm:$0xff] %vm2561, %v2514
      %2587 = vst.msk [vmem:[%s172 + $0xc8] sm:$0xff] %vm2561, %v2516
      %2588 = vst.msk [vmem:[%s172 + $0xd0] sm:$0xff] %vm2561, %v2518
      %2589 = vst.msk [vmem:[%s172 + $0xd8] sm:$0xff] %vm2561, %v2520
      %2590 = vst.msk [vmem:[%s172 + $0xe0] sm:$0xff] %vm2561, %v2522
      %2591 = vst.msk [vmem:[%s172 + $0xe8] sm:$0xff] %vm2561, %v2524
      %2592 = vst.msk [vmem:[%s172 + $0xf0] sm:$0xff] %vm2561, %v2526
      %2593 = vst.msk [vmem:[%s172 + $0xf8] sm:$0xff] %vm2561, %v2528
      %2594 = vrot.lane.b32.xlu0 %v1689, 32
      %v2595 = vpop.permute.xlu0 %2594
      %2596 = vrot.lane.b32.xlu0 %v1690, 32
      %v2597 = vpop.permute.xlu0 %2596
      %2598 = vrot.lane.b32.xlu0 %v1691, 32
      %v2599 = vpop.permute.xlu0 %2598
      %2600 = vrot.lane.b32.xlu0 %v1692, 32
      %v2601 = vpop.permute.xlu0 %2600
      %2602 = vrot.lane.b32.xlu0 %v1693, 32
      %v2603 = vpop.permute.xlu0 %2602
      %2604 = vrot.lane.b32.xlu0 %v1694, 32
      %v2605 = vpop.permute.xlu0 %2604
      %2606 = vrot.lane.b32.xlu0 %v1695, 32
      %v2607 = vpop.permute.xlu0 %2606
      %2608 = vrot.lane.b32.xlu0 %v1696, 32
      %v2609 = vpop.permute.xlu0 %2608
      %2610 = vrot.lane.b32.xlu0 %v1697, 32
      %v2611 = vpop.permute.xlu0 %2610
      %2612 = vrot.lane.b32.xlu0 %v1698, 32
      %v2613 = vpop.permute.xlu0 %2612
      %2614 = vrot.lane.b32.xlu0 %v1699, 32
      %v2615 = vpop.permute.xlu0 %2614
      %2616 = vrot.lane.b32.xlu0 %v1700, 32
      %v2617 = vpop.permute.xlu0 %2616
      %2618 = vrot.lane.b32.xlu0 %v1701, 32
      %v2619 = vpop.permute.xlu0 %2618
      %2620 = vrot.lane.b32.xlu0 %v1702, 32
      %v2621 = vpop.permute.xlu0 %2620
      %2622 = vrot.lane.b32.xlu0 %v1703, 32
      %v2623 = vpop.permute.xlu0 %2622
      %2624 = vrot.lane.b32.xlu0 %v1704, 32
      %v2625 = vpop.permute.xlu0 %2624
      %2626 = vrot.lane.b32.xlu0 %v1705, 32
      %v2627 = vpop.permute.xlu0 %2626
      %2628 = vrot.lane.b32.xlu0 %v1706, 32
      %v2629 = vpop.permute.xlu0 %2628
      %2630 = vrot.lane.b32.xlu0 %v1707, 32
      %v2631 = vpop.permute.xlu0 %2630
      %2632 = vrot.lane.b32.xlu0 %v1708, 32
      %v2633 = vpop.permute.xlu0 %2632
      %2634 = vrot.lane.b32.xlu0 %v1709, 32
      %v2635 = vpop.permute.xlu0 %2634
      %2636 = vrot.lane.b32.xlu0 %v1710, 32
      %v2637 = vpop.permute.xlu0 %2636
      %2638 = vrot.lane.b32.xlu0 %v1711, 32
      %v2639 = vpop.permute.xlu0 %2638
      %2640 = vrot.lane.b32.xlu0 %v1712, 32
      %v2641 = vpop.permute.xlu0 %2640
      %2642 = vrot.lane.b32.xlu0 %v1713, 32
      %v2643 = vpop.permute.xlu0 %2642
      %2644 = vrot.lane.b32.xlu0 %v1714, 32
      %v2645 = vpop.permute.xlu0 %2644
      %2646 = vrot.lane.b32.xlu0 %v1715, 32
      %v2647 = vpop.permute.xlu0 %2646
      %2648 = vrot.lane.b32.xlu0 %v1716, 32
      %v2649 = vpop.permute.xlu0 %2648
      %2650 = vrot.lane.b32.xlu0 %v1717, 32
      %v2651 = vpop.permute.xlu0 %2650
      %2652 = vrot.lane.b32.xlu0 %v1718, 32
      %v2653 = vpop.permute.xlu0 %2652
      %2654 = vrot.lane.b32.xlu0 %v1719, 32
      %v2655 = vpop.permute.xlu0 %2654
      %2656 = vrot.lane.b32.xlu0 %v1720, 32
      %v2657 = vpop.permute.xlu0 %2656
      %vm2690 = vcmask 326912
      %2691 = vst.msk [vmem:[%s172] sm:$0xff] %vm2690, %v2595
      %2692 = vst.msk [vmem:[%s172 + $0x8] sm:$0xff] %vm2690, %v2597
      %2693 = vst.msk [vmem:[%s172 + $0x10] sm:$0xff] %vm2690, %v2599
      %2694 = vst.msk [vmem:[%s172 + $0x18] sm:$0xff] %vm2690, %v2601
      %2695 = vst.msk [vmem:[%s172 + $0x20] sm:$0xff] %vm2690, %v2603
      %2696 = vst.msk [vmem:[%s172 + $0x28] sm:$0xff] %vm2690, %v2605
      %2697 = vst.msk [vmem:[%s172 + $0x30] sm:$0xff] %vm2690, %v2607
      %2698 = vst.msk [vmem:[%s172 + $0x38] sm:$0xff] %vm2690, %v2609
      %2699 = vst.msk [vmem:[%s172 + $0x40] sm:$0xff] %vm2690, %v2611
      %2700 = vst.msk [vmem:[%s172 + $0x48] sm:$0xff] %vm2690, %v2613
      %2701 = vst.msk [vmem:[%s172 + $0x50] sm:$0xff] %vm2690, %v2615
      %2702 = vst.msk [vmem:[%s172 + $0x58] sm:$0xff] %vm2690, %v2617
      %2703 = vst.msk [vmem:[%s172 + $0x60] sm:$0xff] %vm2690, %v2619
      %2704 = vst.msk [vmem:[%s172 + $0x68] sm:$0xff] %vm2690, %v2621
      %2705 = vst.msk [vmem:[%s172 + $0x70] sm:$0xff] %vm2690, %v2623
      %2706 = vst.msk [vmem:[%s172 + $0x78] sm:$0xff] %vm2690, %v2625
      %2707 = vst.msk [vmem:[%s172 + $0x80] sm:$0xff] %vm2690, %v2627
      %2708 = vst.msk [vmem:[%s172 + $0x88] sm:$0xff] %vm2690, %v2629
      %2709 = vst.msk [vmem:[%s172 + $0x90] sm:$0xff] %vm2690, %v2631
      %2710 = vst.msk [vmem:[%s172 + $0x98] sm:$0xff] %vm2690, %v2633
      %2711 = vst.msk [vmem:[%s172 + $0xa0] sm:$0xff] %vm2690, %v2635
      %2712 = vst.msk [vmem:[%s172 + $0xa8] sm:$0xff] %vm2690, %v2637
      %2713 = vst.msk [vmem:[%s172 + $0xb0] sm:$0xff] %vm2690, %v2639
      %2714 = vst.msk [vmem:[%s172 + $0xb8] sm:$0xff] %vm2690, %v2641
      %2715 = vst.msk [vmem:[%s172 + $0xc0] sm:$0xff] %vm2690, %v2643
      %2716 = vst.msk [vmem:[%s172 + $0xc8] sm:$0xff] %vm2690, %v2645
      %2717 = vst.msk [vmem:[%s172 + $0xd0] sm:$0xff] %vm2690, %v2647
      %2718 = vst.msk [vmem:[%s172 + $0xd8] sm:$0xff] %vm2690, %v2649
      %2719 = vst.msk [vmem:[%s172 + $0xe0] sm:$0xff] %vm2690, %v2651
      %2720 = vst.msk [vmem:[%s172 + $0xe8] sm:$0xff] %vm2690, %v2653
      %2721 = vst.msk [vmem:[%s172 + $0xf0] sm:$0xff] %vm2690, %v2655
      %2722 = vst.msk [vmem:[%s172 + $0xf8] sm:$0xff] %vm2690, %v2657
      %s2723 = smul.u32 32, %s14
      %p2724 = scmp.lt.s32.totalorder %s2723, 127
      %s2725 = scalar_select %p2724, %s2723, 127
      %s2726 = smul.addr %s2725, 8
      %s2727 = scalar_lea.vmem %s3, %s2726
      // Predicated region
      $region33: #{civae_forward.1} parent=31 // pred_check
        %p2728 = pneg %p100
      $region34: #{civae_forward.1} parent=31 // pred_check_branch
        %2730 = sbr.rel (%p2728) target = $region36
      $region35: #{civae_forward.1} parent=31 // pred_region
        %s2731 = smul.u32 32, %s14
      $region36: #{civae_forward.1} parent=31 // pred_fallthru
        _
    $region32: #{civae_forward.1} parent=5 // pred_fallthru
      _
    %p2732 = scmp.le.s32.totalorder 2, %s9
    // Predicated region
    $region37: #{civae_forward.1} parent=5 // pred_check
      %p2733 = pneg %p2732
    $region38: #{civae_forward.1} parent=5 // pred_check_branch
      %2735 = sbr.rel (%p2733) target = $region40
    $region39: #{civae_forward.1} parent=5 // pred_region
      %s2736 = ssub.s32 %s9, 2
      // Predicated region
      $region41: #{civae_forward.1} parent=39 // pred_check
        %p2737 = pneg %p106
      $region42: #{civae_forward.1} parent=39 // pred_check_branch
        %2739 = sbr.rel (%p2737) target = $region44
      $region43: #{civae_forward.1} parent=39 // pred_region
        %s2740 = smul.u32 32, %s15
        %p2741 = scmp.lt.s32.totalorder %s2740, 127
        %s2742 = scalar_select %p2741, %s2740, 127
        %s2743 = smul.addr %s2742, 8
        %s2744 = scalar_lea.vmem %s3, %s2743
      $region44: #{civae_forward.1} parent=39 // pred_fallthru
        _
    $region40: #{civae_forward.1} parent=5 // pred_fallthru
      _
  $region6: #{civae_forward.1} parent=0 // loop_footer
    %s13 = sadd.s32 1, %s9
  $region7: #{civae_forward.1} parent=0 // loop_footer_branch
    %8 = sbr.rel target = $region3
  $region8: #{civae_forward.1} parent=0 // loop_exit
    _

</llo_original>
